<compile_context>
chip_gen: v5e
topology: v5e:2x2
jax: 0.10.0
libtpu: 0.0.40
codegen_flags: <defaults>
</compile_context>

<pallas_src>
import math
import numpy as np
import jax
import jax.numpy as jnp
from jax.experimental import pallas as pl
from jax.experimental.pallas import tpu as pltpu

SEG = 128  # lane-tile width; every packed column segment is padded to this


# ------------------------------------------------------------------ MADE masks
def _made_masks(dim_input, hidden_size):
    D, H = dim_input, hidden_size
    in_deg = np.arange(1, D + 1)
    hid_deg = np.arange(H) % max(1, D - 1) + min(1, D - 1)
    # (in, out) orientation to match x @ W
    mask_in = (hid_deg[None, :] >= in_deg[:, None]).astype(np.float32)    # (D, H)
    mask_hid = (hid_deg[None, :] >= hid_deg[:, None]).astype(np.float32)  # (H, H)
    mask_out = (in_deg[None, :] > hid_deg[:, None]).astype(np.float32)    # (H, D)
    return jnp.asarray(mask_in), jnp.asarray(mask_hid), jnp.asarray(mask_out)


# ----------------------------------------------------------- parameter set-up
def init_params(key, dim_input, dim_condition, hidden_size,
                num_coupling_layers, num_blocks):
    D, C, H = dim_input, dim_condition, hidden_size
    mask_in, mask_hid, mask_out = _made_masks(D, H)

    def nrm(k, shape, scale):
        return scale * jax.random.normal(k, shape, dtype=jnp.float32)

    n_keys = num_coupling_layers * (8 + 6 * num_blocks) + 8
    keys = iter(jax.random.split(key, n_keys))

    params = []
    for _ in range(num_coupling_layers):
        # initial masked layer D -> H and context projection C -> H
        params.append(nrm(next(keys), (D, H), 1.0 / math.sqrt(D)) * mask_in)
        params.append(nrm(next(keys), (1, H), 0.05))
        params.append(nrm(next(keys), (C, H), 1.0 / math.sqrt(C)))
        params.append(nrm(next(keys), (1, H), 0.05))
        for _b in range(num_blocks):
            params.append(nrm(next(keys), (H, H), 1.0 / math.sqrt(H)) * mask_hid)
            params.append(nrm(next(keys), (1, H), 0.05))
            params.append(nrm(next(keys), (H, H), 1e-3) * mask_hid)
            params.append(nrm(next(keys), (1, H), 1e-3))
            params.append(nrm(next(keys), (C, H), 1.0 / math.sqrt(C)))
            params.append(nrm(next(keys), (1, H), 0.05))
        # final masked layer H -> 2*D, split as scale cols / shift cols
        params.append(nrm(next(keys), (H, D), 1.0 / math.sqrt(H)) * mask_out)
        params.append(nrm(next(keys), (1, D), 0.05))
        params.append(nrm(next(keys), (H, D), 1.0 / math.sqrt(H)) * mask_out)
        params.append(nrm(next(keys), (1, D), 0.05))
    return params


# --------------------------------------------------------- parameter packing
def pack_params(params, dim_input, dim_condition, hidden_size,
                num_coupling_layers, num_blocks):
    """Pack per-layer params into a few 128-lane-aligned fused arrays."""
    D, C, H = dim_input, dim_condition, hidden_size
    L, NB = num_coupling_layers, num_blocks
    nseg = 1 + L + L * NB   # [x_perm | per-layer h-additive | per-block gate]

    # Reverse-permutation matrix: x @ P == x[:, ::-1]
    P = np.zeros((D, D), np.float32)
    P[np.arange(D), D - 1 - np.arange(D)] = 1.0

    w0 = np.zeros((D + C + 1, SEG * nseg), np.float32)          # fused leading matmul
    w_in_rest = np.zeros((max(L - 1, 1), SEG, 2 * SEG), np.float32)  # layers l>0 only
    w_ab = np.zeros((2 * L * NB, SEG, SEG), np.float32)          # residual-block linears
    w_out = np.zeros((L, SEG, 2 * SEG), np.float32)              # H -> [scale | shift]
    b_all = np.zeros((2 * L * NB + 2 * L, SEG), np.float32)      # all remaining biases

    p = [np.asarray(a, np.float32) for a in params]
    idx = 0
    for l in range(L):
        W0, b0, Wc0, bc0 = p[idx:idx + 4]; idx += 4
        if l == 0:
            # seg 0: reversed x ;  seg 1: full layer-0 pre-activation (x + ctx + biases)
            w0[:D, 0:D] = P
            w0[:D, SEG:SEG + H] = W0[::-1, :]
            w0[D:D + C, SEG:SEG + H] = Wc0
            w0[D + C, SEG:SEG + H] = (b0 + bc0).reshape(-1)
        else:
            s = (1 + l) * SEG                     # ctx-additive slab for layer l (+ biases)
            w0[D:D + C, s:s + H] = Wc0
            w0[D + C, s:s + H] = (b0 + bc0).reshape(-1)
            w_in_rest[l - 1, :D, 0:D] = P
            w_in_rest[l - 1, :D, SEG:SEG + H] = W0[::-1, :]
        for b in range(NB):
            Wa, ba, Wb, bb, Wcb, bcb = p[idx:idx + 6]; idx += 6
            k = l * NB + b
            w_ab[2 * k, :H, :H] = Wa
            w_ab[2 * k + 1, :H, :H] = Wb
            b_all[2 * k, :H] = ba.reshape(-1)
            b_all[2 * k + 1, :H] = bb.reshape(-1)
            g = (1 + L + k) * SEG                 # GLU-gate pre-activation segment
            w0[D:D + C, g:g + H] = Wcb
            w0[D + C, g:g + H] = bcb.reshape(-1)
        Ws, bs, Wt, bt = p[idx:idx + 4]; idx += 4
        w_out[l, :H, 0:D] = Ws
        w_out[l, :H, SEG:SEG + D] = Wt
        b_all[2 * L * NB + 2 * l, :D] = bs.reshape(-1) + 2.0    # +2.0 scale offset baked in
        b_all[2 * L * NB + 2 * l + 1, :D] = bt.reshape(-1)

    packed = [jnp.asarray(w0)]
    if L > 1:
        packed.append(jnp.asarray(w_in_rest))
    packed += [jnp.asarray(w_ab), jnp.asarray(w_out), jnp.asarray(b_all)]
    return packed


# ------------------------------------------------------------------ the kernel
def make_kernel(dim_input, hidden_size, num_coupling_layers, num_blocks):
    D, H, L, NB = dim_input, hidden_size, num_coupling_layers, num_blocks
    LOG_Z = 0.5 * D * math.log(2.0 * math.pi)
    has_rest = L > 1

    def kernel(*refs):
        if has_rest:
            (xc_ref, w0_ref, w_in_rest_ref, w_ab_ref, w_out_ref, b_all_ref,
             out_ref) = refs
        else:
            xc_ref, w0_ref, w_ab_ref, w_out_ref, b_all_ref, out_ref = refs
            w_in_rest_ref = None

        xc = xc_ref[...]                                  # (TB, D+C+1) = [x | ctx | 1]
        tb = xc.shape[0]

        # ONE fused matmul: [x_perm | layer-0 pre-act | ctx-adds (l>0) | all gate pre-acts]
        z0 = jnp.dot(xc, w0_ref[...], preferred_element_type=jnp.float32)

        b_all = b_all_ref[...]                            # (2*L*NB + 2*L, 128)

        # lane mask selecting the real D dims (pad lanes excluded from log-det sum)
        lane = jax.lax.broadcasted_iota(jnp.int32, (1, SEG), 1)
        mask_d = (lane < D).astype(jnp.float32)           # (1, 128)

        logabsdet = jnp.zeros((tb, 1), jnp.float32)
        x = None
        for l in range(L):
            if l == 0:
                x_perm = z0[:, 0:SEG]                     # reversed x, zero-padded
                h = z0[:, SEG:2 * SEG]                    # layer-0 pre-activation
            else:
                zw = jnp.dot(x, w_in_rest_ref[l - 1],
                             preferred_element_type=jnp.float32)   # (TB, 256)
                x_perm = zw[:, 0:SEG]
                h = zw[:, SEG:2 * SEG] + z0[:, (1 + l) * SEG:(2 + l) * SEG]

            # masked residual blocks with context GLU (gate sigmoid deferred per block)
            for b in range(NB):
                k = l * NB + b
                t = jnp.maximum(h, 0.0)
                t = (jnp.dot(t, w_ab_ref[2 * k], preferred_element_type=jnp.float32)
                     + b_all[2 * k:2 * k + 1, :])
                t = jnp.maximum(t, 0.0)
                t = (jnp.dot(t, w_ab_ref[2 * k + 1], preferred_element_type=jnp.float32)
                     + b_all[2 * k + 1:2 * k + 2, :])
                g = (1 + L + k) * SEG
                gate = jax.nn.sigmoid(z0[:, g:g + SEG])   # pad lanes -> 0.5 * t_pad(=0) = 0
                h = h + t * gate

            # fused final masked layer -> [unconstrained scale | shift], 128-aligned halves
            so = jnp.dot(h, w_out_ref[l], preferred_element_type=jnp.float32)  # (TB, 256)
            rs = 2 * L * NB + 2 * l
            scale = jax.nn.sigmoid(so[:, 0:SEG] + b_all[rs:rs + 1, :]) + 1e-3
            shift = so[:, SEG:2 * SEG] + b_all[rs + 1:rs + 2, :]
            x = scale * x_perm + shift                    # pad lanes stay exactly 0
            logabsdet = logabsdet + jnp.sum(jnp.log(scale) * mask_d,
                                            axis=-1, keepdims=True)

        # StandardNormal base log-prob + sum of log-dets, reduced over the tile.
        log_prob = (-0.5 * jnp.sum(x * x, axis=-1, keepdims=True)
                    - LOG_Z + logabsdet)                        # (TB, 1)
        tile_nll = jnp.sum(-log_prob, axis=0, keepdims=True)    # (1, 1)
        # lane-dense per-tile output block; final mean is done in plain JAX
        out_ref[...] = jnp.broadcast_to(tile_nll[:, :, None], (1, 8, 128))

    return kernel


# ------------------------------------------------------------------- wrapper
def pc_maf_forward(inputs, context, params, *, hidden_size, num_coupling_layers,
                   num_blocks, tile_b=None):
    N, D = inputs.shape
    _, C = context.shape
    H, L, NB = hidden_size, num_coupling_layers, num_blocks

    if tile_b is None:
        # one big tile amortizes per-grid-step overhead; ~KB/row so 1024 rows stays
        # well inside even v5e's 16 MiB scoped-VMEM default.
        tile_b = N if N <= 1024 else 1024
        while N % tile_b and tile_b > 8:
            tile_b //= 2
    assert N % tile_b == 0, "batch must be divisible by tile_b"
    grid = N // tile_b

    packed = pack_params(params, D, C, H, L, NB)
    kernel = make_kernel(D, H, L, NB)

    # fused [x | ctx | 1] input: the ones column bakes every first-matmul bias in
    xc = jnp.concatenate(
        [inputs, context, jnp.ones((N, 1), inputs.dtype)], axis=1)

    def const_spec(a):
        nd = a.ndim
        return pl.BlockSpec(a.shape, lambda i, nd=nd: (0,) * nd)

    in_specs = [pl.BlockSpec((tile_b, D + C + 1), lambda i: (i, 0))]
    in_specs += [const_spec(a) for a in packed]

    out = pl.pallas_call(
        kernel,
        out_shape=jax.ShapeDtypeStruct((grid, 8, 128), jnp.float32),
        grid_spec=pltpu.PrefetchScalarGridSpec(
            num_scalar_prefetch=0,
            grid=(grid,),
            in_specs=in_specs,
            out_specs=pl.BlockSpec((1, 8, 128), lambda i: (i, 0, 0)),
        ),
        # per-tile partial sums -> no cross-step accumulation -> axis is parallel
        # (shards across both TensorCores on v7x whenever grid >= 2)
        compiler_params=pltpu.CompilerParams(dimension_semantics=("parallel",)),
    )(xc, *packed)

    return jnp.sum(out[:, 0, 0]) / N    # batch mean of the NLL


# ------------------------------------------------------- pure-JAX reference
def reference_forward(inputs, context, params, dim_input,
                      num_coupling_layers, num_blocks):
    D = dim_input
    x = inputs
    logabsdet = jnp.zeros((x.shape[0],), jnp.float32)
    idx = 0
    for _ in range(num_coupling_layers):
        x = x[:, ::-1]
        W0, b0, Wc0, bc0 = params[idx:idx + 4]; idx += 4
        h = x @ W0 + b0 + context @ Wc0 + bc0
        for _b in range(num_blocks):
            Wa, ba, Wb, bb, Wcb, bcb = params[idx:idx + 6]; idx += 6
            t = jnp.maximum(h, 0.0)
            t = t @ Wa + ba
            t = jnp.maximum(t, 0.0)
            t = t @ Wb + bb
            h = h + t * jax.nn.sigmoid(context @ Wcb + bcb)
        Ws, bs, Wt, bt = params[idx:idx + 4]; idx += 4
        scale = jax.nn.sigmoid(h @ Ws + bs + 2.0) + 1e-3
        shift = h @ Wt + bt
        x = scale * x + shift
        logabsdet = logabsdet + jnp.sum(jnp.log(scale), axis=-1)
    log_z = 0.5 * D * math.log(2.0 * math.pi)
    log_prob = -0.5 * jnp.sum(x * x, axis=-1) - log_z + logabsdet
    return jnp.mean(-log_prob)


# ---------------------------------------------------------------------- main
if __name__ == "__main__":
    # PC_MAF(dim_condition=4, dim_input=8, num_coupling_layers=1,
    #        hidden_size=32, num_blocks_mat=2, activation='relu')
    N, D, C, H = 64, 8, 4, 32
    L, NB = 1, 2

    key = jax.random.PRNGKey(0)
    kx, kc, kp = jax.random.split(key, 3)
    x = jax.random.normal(kx, (N, D), dtype=jnp.float32)
    ctx = jax.random.normal(kc, (N, C), dtype=jnp.float32)
    params = init_params(kp, D, C, H, L, NB)

    out = pc_maf_forward(x, ctx, params, hidden_size=H,
                         num_coupling_layers=L, num_blocks=NB)
    out = jax.block_until_ready(out)

    ref = jax.block_until_ready(reference_forward(x, ctx, params, D, L, NB))
    if not np.allclose(np.asarray(out), np.asarray(ref), rtol=2e-2, atol=2e-2):
        raise AssertionError(f"mismatch: pallas={float(out)} ref={float(ref)}")

    # TODO(synk): sample_pointcloud (inverse/sampling path) is not part of forward()
    # and is not implemented as a kernel.
    print("KERNEL_OK")
</pallas_src>

<mosaic_0001>
module attributes {stable_mosaic.version = 11 : i64} {
  func.func @kernel(%arg0: i32, %arg1: memref<64x13xf32, #tpu.memory_space<vmem>>, %arg2: memref<13x512xf32, #tpu.memory_space<vmem>>, %arg3: memref<4x128x128xf32, #tpu.memory_space<vmem>>, %arg4: memref<1x128x256xf32, #tpu.memory_space<vmem>>, %arg5: memref<6x128xf32, #tpu.memory_space<vmem>>, %arg6: memref<1x8x128xf32, #tpu.memory_space<vmem>>) attributes {dimension_semantics = [#tpu.dimension_semantics<parallel>], iteration_bounds = array<i64: 1>, scalar_prefetch = 0 : i64, scratch_operands = 0 : i64, tpu.core_type = #tpu.core_type<tc>, window_params = [{transform_indices = @transform_0, window_bounds = array<i64: 64, 13>}, {pipeline_mode = #tpu.pipeline_mode<synchronous>, transform_indices = @transform_1, window_bounds = array<i64: 13, 512>}, {pipeline_mode = #tpu.pipeline_mode<synchronous>, transform_indices = @transform_2, window_bounds = array<i64: 4, 128, 128>}, {pipeline_mode = #tpu.pipeline_mode<synchronous>, transform_indices = @transform_3, window_bounds = array<i64: 1, 128, 256>}, {pipeline_mode = #tpu.pipeline_mode<synchronous>, transform_indices = @transform_4, window_bounds = array<i64: 6, 128>}, {transform_indices = @transform_5, window_bounds = array<i64: 1, 8, 128>}]} {
    %c0 = arith.constant 0 : index
    %c0_0 = arith.constant 0 : index
    %0 = vector.load %arg1[%c0, %c0_0] : memref<64x13xf32, #tpu.memory_space<vmem>>, vector<64x13xf32>
    %c0_1 = arith.constant 0 : index
    %c0_2 = arith.constant 0 : index
    %1 = vector.load %arg2[%c0_1, %c0_2] : memref<13x512xf32, #tpu.memory_space<vmem>>, vector<13x512xf32>
    %cst = arith.constant dense<0.000000e+00> : vector<64x512xf32>
    %2 = tpu.matmul %0, %1, %cst {dimension_numbers = #tpu.dot_dimension_numbers<[1], [0], [0], [1], [0, 0, 1, 1], [], []>} : vector<64x13xf32>, vector<13x512xf32>, vector<64x512xf32> -> vector<64x512xf32>
    %c0_3 = arith.constant 0 : index
    %c0_4 = arith.constant 0 : index
    %3 = vector.load %arg5[%c0_3, %c0_4] : memref<6x128xf32, #tpu.memory_space<vmem>>, vector<6x128xf32>
    %4 = tpu.iota {dimensions = array<i32: 1>} : vector<1x128xi32>
    %c8_i32 = arith.constant 8 : i32
    %5 = vector.broadcast %c8_i32 : i32 to vector<1x128xi32>
    %6 = arith.cmpi slt, %4, %5 : vector<1x128xi32>
    %7 = arith.extui %6 : vector<1x128xi1> to vector<1x128xi32>
    %8 = arith.sitofp %7 : vector<1x128xi32> to vector<1x128xf32>
    %cst_5 = arith.constant 0.000000e+00 : f32
    %9 = vector.broadcast %cst_5 : f32 to vector<64x1xf32>
    %10 = vector.extract_strided_slice %2 {offsets = [0, 0], sizes = [64, 128], strides = [1, 1]} : vector<64x512xf32> to vector<64x128xf32>
    %11 = vector.extract_strided_slice %2 {offsets = [0, 128], sizes = [64, 128], strides = [1, 1]} : vector<64x512xf32> to vector<64x128xf32>
    %cst_6 = arith.constant 0.000000e+00 : f32
    %12 = vector.broadcast %cst_6 : f32 to vector<64x128xf32>
    %13 = arith.maximumf %11, %12 : vector<64x128xf32>
    %c0_7 = arith.constant 0 : index
    %c0_8 = arith.constant 0 : index
    %c0_9 = arith.constant 0 : index
    %14 = vector.load %arg3[%c0_7, %c0_8, %c0_9] : memref<4x128x128xf32, #tpu.memory_space<vmem>>, vector<1x128x128xf32>
    %15 = vector.shape_cast %14 : vector<1x128x128xf32> to vector<128x128xf32>
    %cst_10 = arith.constant dense<0.000000e+00> : vector<64x128xf32>
    %16 = tpu.matmul %13, %15, %cst_10 {dimension_numbers = #tpu.dot_dimension_numbers<[1], [0], [0], [1], [0, 0, 1, 1], [], []>} : vector<64x128xf32>, vector<128x128xf32>, vector<64x128xf32> -> vector<64x128xf32>
    %17 = vector.extract_strided_slice %3 {offsets = [0, 0], sizes = [1, 128], strides = [1, 1]} : vector<6x128xf32> to vector<1x128xf32>
    %18 = vector.broadcast %17 : vector<1x128xf32> to vector<64x128xf32>
    %19 = arith.addf %16, %18 : vector<64x128xf32>
    %cst_11 = arith.constant 0.000000e+00 : f32
    %20 = vector.broadcast %cst_11 : f32 to vector<64x128xf32>
    %21 = arith.maximumf %19, %20 : vector<64x128xf32>
    %c1 = arith.constant 1 : index
    %c0_12 = arith.constant 0 : index
    %c0_13 = arith.constant 0 : index
    %22 = vector.load %arg3[%c1, %c0_12, %c0_13] : memref<4x128x128xf32, #tpu.memory_space<vmem>>, vector<1x128x128xf32>
    %23 = vector.shape_cast %22 : vector<1x128x128xf32> to vector<128x128xf32>
    %cst_14 = arith.constant dense<0.000000e+00> : vector<64x128xf32>
    %24 = tpu.matmul %21, %23, %cst_14 {dimension_numbers = #tpu.dot_dimension_numbers<[1], [0], [0], [1], [0, 0, 1, 1], [], []>} : vector<64x128xf32>, vector<128x128xf32>, vector<64x128xf32> -> vector<64x128xf32>
    %25 = vector.extract_strided_slice %3 {offsets = [1, 0], sizes = [1, 128], strides = [1, 1]} : vector<6x128xf32> to vector<1x128xf32>
    %26 = vector.broadcast %25 : vector<1x128xf32> to vector<64x128xf32>
    %27 = arith.addf %24, %26 : vector<64x128xf32>
    %28 = vector.extract_strided_slice %2 {offsets = [0, 256], sizes = [64, 128], strides = [1, 1]} : vector<64x512xf32> to vector<64x128xf32>
    %29 = arith.negf %28 : vector<64x128xf32>
    %30 = math.exp %29 : vector<64x128xf32>
    %cst_15 = arith.constant 1.000000e+00 : f32
    %31 = vector.broadcast %cst_15 : f32 to vector<64x128xf32>
    %32 = arith.addf %31, %30 : vector<64x128xf32>
    %33 = arith.divf %31, %32 : vector<64x128xf32>
    %34 = arith.mulf %27, %33 : vector<64x128xf32>
    %35 = arith.addf %11, %34 : vector<64x128xf32>
    %cst_16 = arith.constant 0.000000e+00 : f32
    %36 = vector.broadcast %cst_16 : f32 to vector<64x128xf32>
    %37 = arith.maximumf %35, %36 : vector<64x128xf32>
    %c2 = arith.constant 2 : index
    %c0_17 = arith.constant 0 : index
    %c0_18 = arith.constant 0 : index
    %38 = vector.load %arg3[%c2, %c0_17, %c0_18] : memref<4x128x128xf32, #tpu.memory_space<vmem>>, vector<1x128x128xf32>
    %39 = vector.shape_cast %38 : vector<1x128x128xf32> to vector<128x128xf32>
    %cst_19 = arith.constant dense<0.000000e+00> : vector<64x128xf32>
    %40 = tpu.matmul %37, %39, %cst_19 {dimension_numbers = #tpu.dot_dimension_numbers<[1], [0], [0], [1], [0, 0, 1, 1], [], []>} : vector<64x128xf32>, vector<128x128xf32>, vector<64x128xf32> -> vector<64x128xf32>
    %41 = vector.extract_strided_slice %3 {offsets = [2, 0], sizes = [1, 128], strides = [1, 1]} : vector<6x128xf32> to vector<1x128xf32>
    %42 = vector.broadcast %41 : vector<1x128xf32> to vector<64x128xf32>
    %43 = arith.addf %40, %42 : vector<64x128xf32>
    %cst_20 = arith.constant 0.000000e+00 : f32
    %44 = vector.broadcast %cst_20 : f32 to vector<64x128xf32>
    %45 = arith.maximumf %43, %44 : vector<64x128xf32>
    %c3 = arith.constant 3 : index
    %c0_21 = arith.constant 0 : index
    %c0_22 = arith.constant 0 : index
    %46 = vector.load %arg3[%c3, %c0_21, %c0_22] : memref<4x128x128xf32, #tpu.memory_space<vmem>>, vector<1x128x128xf32>
    %47 = vector.shape_cast %46 : vector<1x128x128xf32> to vector<128x128xf32>
    %cst_23 = arith.constant dense<0.000000e+00> : vector<64x128xf32>
    %48 = tpu.matmul %45, %47, %cst_23 {dimension_numbers = #tpu.dot_dimension_numbers<[1], [0], [0], [1], [0, 0, 1, 1], [], []>} : vector<64x128xf32>, vector<128x128xf32>, vector<64x128xf32> -> vector<64x128xf32>
    %49 = vector.extract_strided_slice %3 {offsets = [3, 0], sizes = [1, 128], strides = [1, 1]} : vector<6x128xf32> to vector<1x128xf32>
    %50 = vector.broadcast %49 : vector<1x128xf32> to vector<64x128xf32>
    %51 = arith.addf %48, %50 : vector<64x128xf32>
    %52 = vector.extract_strided_slice %2 {offsets = [0, 384], sizes = [64, 128], strides = [1, 1]} : vector<64x512xf32> to vector<64x128xf32>
    %53 = arith.negf %52 : vector<64x128xf32>
    %54 = math.exp %53 : vector<64x128xf32>
    %cst_24 = arith.constant 1.000000e+00 : f32
    %55 = vector.broadcast %cst_24 : f32 to vector<64x128xf32>
    %56 = arith.addf %55, %54 : vector<64x128xf32>
    %57 = arith.divf %55, %56 : vector<64x128xf32>
    %58 = arith.mulf %51, %57 : vector<64x128xf32>
    %59 = arith.addf %35, %58 : vector<64x128xf32>
    %c0_25 = arith.constant 0 : index
    %c0_26 = arith.constant 0 : index
    %c0_27 = arith.constant 0 : index
    %60 = vector.load %arg4[%c0_25, %c0_26, %c0_27] : memref<1x128x256xf32, #tpu.memory_space<vmem>>, vector<1x128x256xf32>
    %61 = vector.shape_cast %60 : vector<1x128x256xf32> to vector<128x256xf32>
    %cst_28 = arith.constant dense<0.000000e+00> : vector<64x256xf32>
    %62 = tpu.matmul %59, %61, %cst_28 {dimension_numbers = #tpu.dot_dimension_numbers<[1], [0], [0], [1], [0, 0, 1, 1], [], []>} : vector<64x128xf32>, vector<128x256xf32>, vector<64x256xf32> -> vector<64x256xf32>
    %63 = vector.extract_strided_slice %62 {offsets = [0, 0], sizes = [64, 128], strides = [1, 1]} : vector<64x256xf32> to vector<64x128xf32>
    %64 = vector.extract_strided_slice %3 {offsets = [4, 0], sizes = [1, 128], strides = [1, 1]} : vector<6x128xf32> to vector<1x128xf32>
    %65 = vector.broadcast %64 : vector<1x128xf32> to vector<64x128xf32>
    %66 = arith.addf %63, %65 : vector<64x128xf32>
    %67 = arith.negf %66 : vector<64x128xf32>
    %68 = math.exp %67 : vector<64x128xf32>
    %cst_29 = arith.constant 1.000000e+00 : f32
    %69 = vector.broadcast %cst_29 : f32 to vector<64x128xf32>
    %70 = arith.addf %69, %68 : vector<64x128xf32>
    %71 = arith.divf %69, %70 : vector<64x128xf32>
    %cst_30 = arith.constant 1.000000e-03 : f32
    %72 = vector.broadcast %cst_30 : f32 to vector<64x128xf32>
    %73 = arith.addf %71, %72 : vector<64x128xf32>
    %74 = vector.extract_strided_slice %62 {offsets = [0, 128], sizes = [64, 128], strides = [1, 1]} : vector<64x256xf32> to vector<64x128xf32>
    %75 = vector.extract_strided_slice %3 {offsets = [5, 0], sizes = [1, 128], strides = [1, 1]} : vector<6x128xf32> to vector<1x128xf32>
    %76 = vector.broadcast %75 : vector<1x128xf32> to vector<64x128xf32>
    %77 = arith.addf %74, %76 : vector<64x128xf32>
    %78 = arith.mulf %73, %10 : vector<64x128xf32>
    %79 = arith.addf %78, %77 : vector<64x128xf32>
    %80 = math.log %73 : vector<64x128xf32>
    %81 = vector.broadcast %8 : vector<1x128xf32> to vector<64x128xf32>
    %82 = arith.mulf %80, %81 : vector<64x128xf32>
    %cst_31 = arith.constant dense<0.000000e+00> : vector<64xf32>
    %83 = vector.multi_reduction <add>, %82, %cst_31 [1] : vector<64x128xf32> to vector<64xf32>
    %84 = vector.shape_cast %83 : vector<64xf32> to vector<64x1xf32>
    %85 = arith.addf %9, %84 : vector<64x1xf32>
    %86 = arith.mulf %79, %79 : vector<64x128xf32>
    %cst_32 = arith.constant dense<0.000000e+00> : vector<64xf32>
    %87 = vector.multi_reduction <add>, %86, %cst_32 [1] : vector<64x128xf32> to vector<64xf32>
    %88 = vector.shape_cast %87 : vector<64xf32> to vector<64x1xf32>
    %cst_33 = arith.constant -5.000000e-01 : f32
    %89 = vector.broadcast %cst_33 : f32 to vector<64x1xf32>
    %90 = arith.mulf %89, %88 : vector<64x1xf32>
    %cst_34 = arith.constant 7.35150814 : f32
    %91 = vector.broadcast %cst_34 : f32 to vector<64x1xf32>
    %92 = arith.subf %90, %91 : vector<64x1xf32>
    %93 = arith.addf %92, %85 : vector<64x1xf32>
    %cst_35 = arith.constant 0.000000e+00 : f32
    %94 = vector.broadcast %cst_35 : f32 to vector<64x1xf32>
    %95 = arith.subf %94, %93 : vector<64x1xf32>
    %cst_36 = arith.constant dense<0.000000e+00> : vector<1xf32>
    %96 = vector.multi_reduction <add>, %95, %cst_36 [0] : vector<64x1xf32> to vector<1xf32>
    %97 = vector.shape_cast %96 : vector<1xf32> to vector<1x1xf32>
    %98 = vector.shape_cast %97 : vector<1x1xf32> to vector<1x1x1xf32>
    %99 = vector.shape_cast %98 : vector<1x1x1xf32> to vector<1x1x1xf32>
    %100 = vector.broadcast %99 : vector<1x1x1xf32> to vector<1x8x128xf32>
    %c0_37 = arith.constant 0 : index
    %c0_38 = arith.constant 0 : index
    %c0_39 = arith.constant 0 : index
    %101 = vector.load %arg6[%c0_37, %c0_38, %c0_39] : memref<1x8x128xf32, #tpu.memory_space<vmem>>, vector<1x8x128xf32>
    tpu.vector_store %arg6[%c0_37, %c0_38, %c0_39], %100 {strides = array<i32>} : memref<1x8x128xf32, #tpu.memory_space<vmem>>, vector<1x8x128xf32>,
    return
  }
  func.func @transform_0(%arg0: i32) -> (i32, i32) {
    %c0_i32 = arith.constant 0 : i32
    %c0_i32_0 = arith.constant 0 : i32
    return %arg0, %c0_i32 : i32, i32
  }
  func.func @transform_1(%arg0: i32) -> (i32, i32) {
    %c0_i32 = arith.constant 0 : i32
    %c0_i32_0 = arith.constant 0 : i32
    %c0_i32_1 = arith.constant 0 : i32
    return %c0_i32, %c0_i32_0 : i32, i32
  }
  func.func @transform_2(%arg0: i32) -> (i32, i32, i32) {
    %c0_i32 = arith.constant 0 : i32
    %c0_i32_0 = arith.constant 0 : i32
    %c0_i32_1 = arith.constant 0 : i32
    %c0_i32_2 = arith.constant 0 : i32
    return %c0_i32, %c0_i32_0, %c0_i32_1 : i32, i32, i32
  }
  func.func @transform_3(%arg0: i32) -> (i32, i32, i32) {
    %c0_i32 = arith.constant 0 : i32
    %c0_i32_0 = arith.constant 0 : i32
    %c0_i32_1 = arith.constant 0 : i32
    %c0_i32_2 = arith.constant 0 : i32
    return %c0_i32, %c0_i32_0, %c0_i32_1 : i32, i32, i32
  }
  func.func @transform_4(%arg0: i32) -> (i32, i32) {
    %c0_i32 = arith.constant 0 : i32
    %c0_i32_0 = arith.constant 0 : i32
    %c0_i32_1 = arith.constant 0 : i32
    return %c0_i32, %c0_i32_0 : i32, i32
  }
  func.func @transform_5(%arg0: i32) -> (i32, i32, i32) {
    %c0_i32 = arith.constant 0 : i32
    %c0_i32_0 = arith.constant 0 : i32
    %c0_i32_1 = arith.constant 0 : i32
    return %arg0, %c0_i32, %c0_i32_0 : i32, i32, i32
  }
}

</mosaic_0001>

<llo_original>
// kernel: tpu_custom_call.1
$region0: #{tpu_custom_call.1}
  #allocation0 [shape = 'u32[]', space=smem, size = 0x4, offset = 0x4, fixed_abs, tag = 'smem constant byte address 0x4 - core index']
  #allocation1 [shape = 'u32[72,128]{1,0:T(1,128)}', space=vmem, size = 0x9000, scoped, tag = 'internal scratch']
  %s0 = inlined_call_operand.vmem [shape: f32[64,13], index: 0, kind: input, shape index: {}]
  %s1 = inlined_call_operand.vmem [shape: f32[13,512], index: 1, kind: input, shape index: {}]
  %s2 = inlined_call_operand.hbm [shape: f32[4,128,128], index: 2, kind: input, shape index: {}]
  %s3 = inlined_call_operand.hbm [shape: f32[1,128,256], index: 3, kind: input, shape index: {}]
  %s4 = inlined_call_operand.vmem [shape: f32[6,128], index: 4, kind: input, shape index: {}]
  %s5 = inlined_call_operand.hbm [shape: f32[1,8,128], index: 5, kind: output, shape index: {}]
  %s6 = sld [smem:[#allocation0]]
  $region38: #{tpu_custom_call.1} parent=0
    _
  %s8 = ssub.s32 1, %s6
  %s9 = scalar_select 0, %s8, %s6
  $region1: #{tpu_custom_call.1} parent=0
    #allocation2 [shape = 'u8[262144]{0}', space=vmem, size = 0x40000, scoped, tag = 'input window, operand 2, single buffered']
    #allocation3 [shape = 's32[1]{0}', space=sflag, size = 0x4, scoped, tag = 'scoped memory for tpu_custom_call.1']
    #allocation4 [shape = 's32[1]{0}', space=sflag, size = 0x4, scoped, tag = 'scoped memory for tpu_custom_call.1']
    #allocation5 [shape = 'u8[131072]{0}', space=vmem, size = 0x20000, scoped, tag = 'input window, operand 3, single buffered']
    #allocation6 [shape = 's32[1]{0}', space=sflag, size = 0x4, scoped, tag = 'scoped memory for tpu_custom_call.1']
    #allocation7 [shape = 'u8[4096]{0}', space=vmem, size = 0x1000, scoped, tag = 'output window, operand 0, single buffered']
    %10 = vsyncpa [#allocation3], 0
    %11 = vsyncpa [#allocation6], 0
    %12 = vsyncpa [#allocation4], 0
    // Predicated region
    $region2: #{tpu_custom_call.1} parent=1 // pred_check
      _
    $region3: #{tpu_custom_call.1} parent=1 // pred_check_branch
      %14 = sbr.rel (0) target = $region5
    $region4: #{tpu_custom_call.1} parent=1 // pred_region
      _
    $region5: #{tpu_custom_call.1} parent=1 // pred_fallthru
      _
    // Predicated region
    $region6: #{tpu_custom_call.1} parent=1 // pred_check
      _
    $region7: #{tpu_custom_call.1} parent=1 // pred_check_branch
      %16 = sbr.rel (0) target = $region9
    $region8: #{tpu_custom_call.1} parent=1 // pred_region
      _
    $region9: #{tpu_custom_call.1} parent=1 // pred_fallthru
      _
    // Predicated region
    $region10: #{tpu_custom_call.1} parent=1 // pred_check
      _
    $region11: #{tpu_custom_call.1} parent=1 // pred_check_branch
      %18 = sbr.rel (0) target = $region13
    $region12: #{tpu_custom_call.1} parent=1 // pred_region
      %20 = vsyncadd [#allocation3], 0
      %s21 = sshll.u32 %s2, 4
      %s22 = int_to_ptr.hbm [resolvable:$true] %s21
      %s23 = sshll.u32 [#allocation2], 4
      %s24 = int_to_ptr.vmem [resolvable:$true] %s23
      %29 = dma.hbm_to_vmem [thread:$0]  %s22, 8192, %s24, [#allocation3], 128, 128, 8
    $region13: #{tpu_custom_call.1} parent=1 // pred_fallthru
      _
    // Predicated region
    $region14: #{tpu_custom_call.1} parent=1 // pred_check
      _
    $region15: #{tpu_custom_call.1} parent=1 // pred_check_branch
      %31 = sbr.rel (0) target = $region17
    $region16: #{tpu_custom_call.1} parent=1 // pred_region
      %33 = vsyncadd [#allocation6], 0
      %s34 = sshll.u32 %s3, 4
      %s35 = int_to_ptr.hbm [resolvable:$true] %s34
      %s36 = sshll.u32 [#allocation5], 4
      %s37 = int_to_ptr.vmem [resolvable:$true] %s36
      %42 = dma.hbm_to_vmem [thread:$0]  %s35, 4096, %s37, [#allocation6], 256, 256, 16
    $region17: #{tpu_custom_call.1} parent=1 // pred_fallthru
      _
    // Predicated region
    $region18: #{tpu_custom_call.1} parent=1 // pred_check
      _
    $region19: #{tpu_custom_call.1} parent=1 // pred_check_branch
      %44 = sbr.rel (0) target = $region21
    $region20: #{tpu_custom_call.1} parent=1 // pred_region
      _
    $region21: #{tpu_custom_call.1} parent=1 // pred_fallthru
      _
    // Predicated region
    $region22: #{tpu_custom_call.1} parent=1 // pred_check
      _
    $region23: #{tpu_custom_call.1} parent=1 // pred_check_branch
      %46 = sbr.rel (0) target = $region25
    $region24: #{tpu_custom_call.1} parent=1 // pred_region
      %48 = dma.done [#allocation3], 8192
    $region25: #{tpu_custom_call.1} parent=1 // pred_fallthru
      _
    // Predicated region
    $region26: #{tpu_custom_call.1} parent=1 // pred_check
      _
    $region27: #{tpu_custom_call.1} parent=1 // pred_check_branch
      %50 = sbr.rel (0) target = $region29
    $region28: #{tpu_custom_call.1} parent=1 // pred_region
      %52 = dma.done [#allocation6], 4096
    $region29: #{tpu_custom_call.1} parent=1 // pred_fallthru
      _
    %v53 = vld [vmem:[%s0] sm:$0xff]
    %v54 = vld [vmem:[%s0 + $0x8] sm:$0xff]
    %v55 = vld [vmem:[%s0 + $0x10] sm:$0xff]
    %v56 = vld [vmem:[%s0 + $0x18] sm:$0xff]
    %v57 = vld [vmem:[%s0 + $0x20] sm:$0xff]
    %v58 = vld [vmem:[%s0 + $0x28] sm:$0xff]
    %v59 = vld [vmem:[%s0 + $0x30] sm:$0xff]
    %v60 = vld [vmem:[%s0 + $0x38] sm:$0xff]
    %v61 = vld [vmem:[%s1] sm:$0xff]
    %v62 = vld [vmem:[%s1 + $0x8] sm:$0xff]
    %v63 = vld [vmem:[%s1 + $0x10] sm:$0xff]
    %v64 = vld [vmem:[%s1 + $0x18] sm:$0xff]
    %v65 = vld [vmem:[%s1 + $0x20] sm:$0x1f]
    %v66 = vld [vmem:[%s1 + $0x28] sm:$0x1f]
    %v67 = vld [vmem:[%s1 + $0x30] sm:$0x1f]
    %v68 = vld [vmem:[%s1 + $0x38] sm:$0x1f]
    %vm69 = vcmask 105472
    %v71 = vsel %vm69, %v53, 0
    %v74 = vsel %vm69, %v54, 0
    %v77 = vsel %vm69, %v55, 0
    %v80 = vsel %vm69, %v56, 0
    %v83 = vsel %vm69, %v57, 0
    %v86 = vsel %vm69, %v58, 0
    %v89 = vsel %vm69, %v59, 0
    %v92 = vsel %vm69, %v60, 0
    %vm94 = vcmask 1044480
    %v96 = vsel %vm94, %v65, 0
    %v99 = vsel %vm94, %v66, 0
    %v102 = vsel %vm94, %v67, 0
    %v105 = vsel %vm94, %v68, 0
    %107 = vmatpush.msra.mxu0 0.0
    %108 = vmatpush.msra.mxu0 0.0
    %109 = vmatpush.msra.mxu0 0.0
    %110 = vmatpush.msra.mxu0 0.0
    %111 = vmatpush.msra.mxu0 0.0
    %112 = vmatpush.msra.mxu0 0.0
    %113 = vmatpush.msra.mxu0 0.0
    %114 = vmatpush.msra.mxu0 0.0
    %115 = vmatpush.msra.mxu0 0.0
    %116 = vmatpush.msra.mxu0 0.0
    %117 = vmatpush.msra.mxu0 0.0
    %118 = vmatpush.msra.mxu0 0.0
    %119 = vmatpush.msra.mxu0 0.0
    %120 = vmatpush.msra.mxu0 0.0
    %121 = vmatpush.msra.mxu0 %v96
    %122 = vmatpush.msra.mxu0 %v61
    %123 = vmatmul.f32.gmra.mxu0 %v71
    %v124 = vpop.f32.mrf.mxu0
    %v125 = vadd.f32 0.0, %v124
    %126 = vmatmul.f32.gmra.mxu0 %v74
    %v127 = vpop.f32.mrf.mxu0
    %v128 = vadd.f32 0.0, %v127
    %129 = vmatmul.f32.gmra.mxu0 %v77
    %v130 = vpop.f32.mrf.mxu0
    %v131 = vadd.f32 0.0, %v130
    %132 = vmatmul.f32.gmra.mxu0 %v80
    %v133 = vpop.f32.mrf.mxu0
    %v134 = vadd.f32 0.0, %v133
    %135 = vmatmul.f32.gmra.mxu0 %v83
    %v136 = vpop.f32.mrf.mxu0
    %v137 = vadd.f32 0.0, %v136
    %138 = vmatmul.f32.gmra.mxu0 %v86
    %v139 = vpop.f32.mrf.mxu0
    %v140 = vadd.f32 0.0, %v139
    %141 = vmatmul.f32.gmra.mxu0 %v89
    %v142 = vpop.f32.mrf.mxu0
    %v143 = vadd.f32 0.0, %v142
    %144 = vmatmul.f32.gmra.mxu0 %v92
    %v145 = vpop.f32.mrf.mxu0
    %v146 = vadd.f32 0.0, %v145
    %147 = vdwg.mxu0
    %148 = vmatpush.msra.mxu0 0.0
    %149 = vmatpush.msra.mxu0 0.0
    %150 = vmatpush.msra.mxu0 0.0
    %151 = vmatpush.msra.mxu0 0.0
    %152 = vmatpush.msra.mxu0 0.0
    %153 = vmatpush.msra.mxu0 0.0
    %154 = vmatpush.msra.mxu0 0.0
    %155 = vmatpush.msra.mxu0 0.0
    %156 = vmatpush.msra.mxu0 0.0
    %157 = vmatpush.msra.mxu0 0.0
    %158 = vmatpush.msra.mxu0 0.0
    %159 = vmatpush.msra.mxu0 0.0
    %160 = vmatpush.msra.mxu0 0.0
    %161 = vmatpush.msra.mxu0 0.0
    %162 = vmatpush.msra.mxu0 %v99
    %163 = vmatpush.msra.mxu0 %v62
    %164 = vmatmul.f32.gmra.mxu0 %v71
    %v165 = vpop.f32.mrf.mxu0
    %v166 = vadd.f32 0.0, %v165
    %167 = vmatmul.f32.gmra.mxu0 %v74
    %v168 = vpop.f32.mrf.mxu0
    %v169 = vadd.f32 0.0, %v168
    %170 = vmatmul.f32.gmra.mxu0 %v77
    %v171 = vpop.f32.mrf.mxu0
    %v172 = vadd.f32 0.0, %v171
    %173 = vmatmul.f32.gmra.mxu0 %v80
    %v174 = vpop.f32.mrf.mxu0
    %v175 = vadd.f32 0.0, %v174
    %176 = vmatmul.f32.gmra.mxu0 %v83
    %v177 = vpop.f32.mrf.mxu0
    %v178 = vadd.f32 0.0, %v177
    %179 = vmatmul.f32.gmra.mxu0 %v86
    %v180 = vpop.f32.mrf.mxu0
    %v181 = vadd.f32 0.0, %v180
    %182 = vmatmul.f32.gmra.mxu0 %v89
    %v183 = vpop.f32.mrf.mxu0
    %v184 = vadd.f32 0.0, %v183
    %185 = vmatmul.f32.gmra.mxu0 %v92
    %v186 = vpop.f32.mrf.mxu0
    %v187 = vadd.f32 0.0, %v186
    %188 = vdwg.mxu0
    %189 = vmatpush.msra.mxu0 0.0
    %190 = vmatpush.msra.mxu0 0.0
    %191 = vmatpush.msra.mxu0 0.0
    %192 = vmatpush.msra.mxu0 0.0
    %193 = vmatpush.msra.mxu0 0.0
    %194 = vmatpush.msra.mxu0 0.0
    %195 = vmatpush.msra.mxu0 0.0
    %196 = vmatpush.msra.mxu0 0.0
    %197 = vmatpush.msra.mxu0 0.0
    %198 = vmatpush.msra.mxu0 0.0
    %199 = vmatpush.msra.mxu0 0.0
    %200 = vmatpush.msra.mxu0 0.0
    %201 = vmatpush.msra.mxu0 0.0
    %202 = vmatpush.msra.mxu0 0.0
    %203 = vmatpush.msra.mxu0 %v102
    %204 = vmatpush.msra.mxu0 %v63
    %205 = vmatmul.f32.gmra.mxu0 %v71
    %v206 = vpop.f32.mrf.mxu0
    %v207 = vadd.f32 0.0, %v206
    %208 = vmatmul.f32.gmra.mxu0 %v74
    %v209 = vpop.f32.mrf.mxu0
    %v210 = vadd.f32 0.0, %v209
    %211 = vmatmul.f32.gmra.mxu0 %v77
    %v212 = vpop.f32.mrf.mxu0
    %v213 = vadd.f32 0.0, %v212
    %214 = vmatmul.f32.gmra.mxu0 %v80
    %v215 = vpop.f32.mrf.mxu0
    %v216 = vadd.f32 0.0, %v215
    %217 = vmatmul.f32.gmra.mxu0 %v83
    %v218 = vpop.f32.mrf.mxu0
    %v219 = vadd.f32 0.0, %v218
    %220 = vmatmul.f32.gmra.mxu0 %v86
    %v221 = vpop.f32.mrf.mxu0
    %v222 = vadd.f32 0.0, %v221
    %223 = vmatmul.f32.gmra.mxu0 %v89
    %v224 = vpop.f32.mrf.mxu0
    %v225 = vadd.f32 0.0, %v224
    %226 = vmatmul.f32.gmra.mxu0 %v92
    %v227 = vpop.f32.mrf.mxu0
    %v228 = vadd.f32 0.0, %v227
    %229 = vdwg.mxu0
    %230 = vmatpush.msra.mxu0 0.0
    %231 = vmatpush.msra.mxu0 0.0
    %232 = vmatpush.msra.mxu0 0.0
    %233 = vmatpush.msra.mxu0 0.0
    %234 = vmatpush.msra.mxu0 0.0
    %235 = vmatpush.msra.mxu0 0.0
    %236 = vmatpush.msra.mxu0 0.0
    %237 = vmatpush.msra.mxu0 0.0
    %238 = vmatpush.msra.mxu0 0.0
    %239 = vmatpush.msra.mxu0 0.0
    %240 = vmatpush.msra.mxu0 0.0
    %241 = vmatpush.msra.mxu0 0.0
    %242 = vmatpush.msra.mxu0 0.0
    %243 = vmatpush.msra.mxu0 0.0
    %244 = vmatpush.msra.mxu0 %v105
    %245 = vmatpush.msra.mxu0 %v64
    %246 = vmatmul.f32.gmra.mxu0 %v71
    %v247 = vpop.f32.mrf.mxu0
    %v248 = vadd.f32 0.0, %v247
    %249 = vmatmul.f32.gmra.mxu0 %v74
    %v250 = vpop.f32.mrf.mxu0
    %v251 = vadd.f32 0.0, %v250
    %252 = vmatmul.f32.gmra.mxu0 %v77
    %v253 = vpop.f32.mrf.mxu0
    %v254 = vadd.f32 0.0, %v253
    %255 = vmatmul.f32.gmra.mxu0 %v80
    %v256 = vpop.f32.mrf.mxu0
    %v257 = vadd.f32 0.0, %v256
    %258 = vmatmul.f32.gmra.mxu0 %v83
    %v259 = vpop.f32.mrf.mxu0
    %v260 = vadd.f32 0.0, %v259
    %261 = vmatmul.f32.gmra.mxu0 %v86
    %v262 = vpop.f32.mrf.mxu0
    %v263 = vadd.f32 0.0, %v262
    %264 = vmatmul.f32.gmra.mxu0 %v89
    %v265 = vpop.f32.mrf.mxu0
    %v266 = vadd.f32 0.0, %v265
    %267 = vmatmul.f32.gmra.mxu0 %v92
    %v268 = vpop.f32.mrf.mxu0
    %v269 = vadd.f32 0.0, %v268
    %270 = vdwg.mxu0
    %v271 = vld [vmem:[%s4] sm:$0x3f]
    %v272 = vlaneseq
    %v273 = vand.u32 %v272, 127
    %vm274 = vcmp.lt.s32.totalorder %v273, 8
    %v275 = vsel %vm274, 1, 0
    %v276 = vcvt.s32.f32 %v275
    %v277 = vmax.f32 %v166, 0.0
    %v278 = vmax.f32 %v169, 0.0
    %v279 = vmax.f32 %v172, 0.0
    %v280 = vmax.f32 %v175, 0.0
    %v281 = vmax.f32 %v178, 0.0
    %v282 = vmax.f32 %v181, 0.0
    %v283 = vmax.f32 %v184, 0.0
    %v284 = vmax.f32 %v187, 0.0
    %v285 = vld [vmem:[#allocation2] sm:$0xff]
    %v286 = vld [vmem:[#allocation2 + $0x8] sm:$0xff]
    %v287 = vld [vmem:[#allocation2 + $0x10] sm:$0xff]
    %v288 = vld [vmem:[#allocation2 + $0x18] sm:$0xff]
    %v289 = vld [vmem:[#allocation2 + $0x20] sm:$0xff]
    %v290 = vld [vmem:[#allocation2 + $0x28] sm:$0xff]
    %v291 = vld [vmem:[#allocation2 + $0x30] sm:$0xff]
    %v292 = vld [vmem:[#allocation2 + $0x38] sm:$0xff]
    %v293 = vld [vmem:[#allocation2 + $0x40] sm:$0xff]
    %v294 = vld [vmem:[#allocation2 + $0x48] sm:$0xff]
    %v295 = vld [vmem:[#allocation2 + $0x50] sm:$0xff]
    %v296 = vld [vmem:[#allocation2 + $0x58] sm:$0xff]
    %v297 = vld [vmem:[#allocation2 + $0x60] sm:$0xff]
    %v298 = vld [vmem:[#allocation2 + $0x68] sm:$0xff]
    %v299 = vld [vmem:[#allocation2 + $0x70] sm:$0xff]
    %v300 = vld [vmem:[#allocation2 + $0x78] sm:$0xff]
    %v301 = vperm.slane %v271, 0
    %302 = vmatpush.msra.mxu0 %v300
    %303 = vmatpush.msra.mxu0 %v299
    %304 = vmatpush.msra.mxu0 %v298
    %305 = vmatpush.msra.mxu0 %v297
    %306 = vmatpush.msra.mxu0 %v296
    %307 = vmatpush.msra.mxu0 %v295
    %308 = vmatpush.msra.mxu0 %v294
    %309 = vmatpush.msra.mxu0 %v293
    %310 = vmatpush.msra.mxu0 %v292
    %311 = vmatpush.msra.mxu0 %v291
    %312 = vmatpush.msra.mxu0 %v290
    %313 = vmatpush.msra.mxu0 %v289
    %314 = vmatpush.msra.mxu0 %v288
    %315 = vmatpush.msra.mxu0 %v287
    %316 = vmatpush.msra.mxu0 %v286
    %317 = vmatpush.msra.mxu0 %v285
    %318 = vmatmul.f32.gmra.mxu0 %v277
    %v319 = vpop.f32.mrf.mxu0
    %v320 = vadd.f32 %v301, %v319
    %321 = vmatmul.f32.gmra.mxu0 %v278
    %v322 = vpop.f32.mrf.mxu0
    %v323 = vadd.f32 %v301, %v322
    %324 = vmatmul.f32.gmra.mxu0 %v279
    %v325 = vpop.f32.mrf.mxu0
    %v326 = vadd.f32 %v301, %v325
    %327 = vmatmul.f32.gmra.mxu0 %v280
    %v328 = vpop.f32.mrf.mxu0
    %v329 = vadd.f32 %v301, %v328
    %330 = vmatmul.f32.gmra.mxu0 %v281
    %v331 = vpop.f32.mrf.mxu0
    %v332 = vadd.f32 %v301, %v331
    %333 = vmatmul.f32.gmra.mxu0 %v282
    %v334 = vpop.f32.mrf.mxu0
    %v335 = vadd.f32 %v301, %v334
    %336 = vmatmul.f32.gmra.mxu0 %v283
    %v337 = vpop.f32.mrf.mxu0
    %v338 = vadd.f32 %v301, %v337
    %339 = vmatmul.f32.gmra.mxu0 %v284
    %v340 = vpop.f32.mrf.mxu0
    %v341 = vadd.f32 %v301, %v340
    %342 = vdwg.mxu0
    %v343 = vmax.f32 %v320, 0.0
    %v344 = vmax.f32 %v323, 0.0
    %v345 = vmax.f32 %v326, 0.0
    %v346 = vmax.f32 %v329, 0.0
    %v347 = vmax.f32 %v332, 0.0
    %v348 = vmax.f32 %v335, 0.0
    %v349 = vmax.f32 %v338, 0.0
    %v350 = vmax.f32 %v341, 0.0
    %s351 = scalar_lea.vmem [#allocation2], 128
    %v352 = vld [vmem:[%s351] sm:$0xff]
    %v353 = vld [vmem:[%s351 + $0x8] sm:$0xff]
    %v354 = vld [vmem:[%s351 + $0x10] sm:$0xff]
    %v355 = vld [vmem:[%s351 + $0x18] sm:$0xff]
    %v356 = vld [vmem:[%s351 + $0x20] sm:$0xff]
    %v357 = vld [vmem:[%s351 + $0x28] sm:$0xff]
    %v358 = vld [vmem:[%s351 + $0x30] sm:$0xff]
    %v359 = vld [vmem:[%s351 + $0x38] sm:$0xff]
    %v360 = vld [vmem:[%s351 + $0x40] sm:$0xff]
    %v361 = vld [vmem:[%s351 + $0x48] sm:$0xff]
    %v362 = vld [vmem:[%s351 + $0x50] sm:$0xff]
    %v363 = vld [vmem:[%s351 + $0x58] sm:$0xff]
    %v364 = vld [vmem:[%s351 + $0x60] sm:$0xff]
    %v365 = vld [vmem:[%s351 + $0x68] sm:$0xff]
    %v366 = vld [vmem:[%s351 + $0x70] sm:$0xff]
    %v367 = vld [vmem:[%s351 + $0x78] sm:$0xff]
    %v368 = vperm.slane %v271, 1
    %369 = vmatpush.msra.mxu0 %v367
    %370 = vmatpush.msra.mxu0 %v366
    %371 = vmatpush.msra.mxu0 %v365
    %372 = vmatpush.msra.mxu0 %v364
    %373 = vmatpush.msra.mxu0 %v363
    %374 = vmatpush.msra.mxu0 %v362
    %375 = vmatpush.msra.mxu0 %v361
    %376 = vmatpush.msra.mxu0 %v360
    %377 = vmatpush.msra.mxu0 %v359
    %378 = vmatpush.msra.mxu0 %v358
    %379 = vmatpush.msra.mxu0 %v357
    %380 = vmatpush.msra.mxu0 %v356
    %381 = vmatpush.msra.mxu0 %v355
    %382 = vmatpush.msra.mxu0 %v354
    %383 = vmatpush.msra.mxu0 %v353
    %384 = vmatpush.msra.mxu0 %v352
    %385 = vmatmul.f32.gmra.mxu0 %v343
    %v386 = vpop.f32.mrf.mxu0
    %v387 = vadd.f32 %v368, %v386
    %388 = vmatmul.f32.gmra.mxu0 %v344
    %v389 = vpop.f32.mrf.mxu0
    %v390 = vadd.f32 %v368, %v389
    %391 = vmatmul.f32.gmra.mxu0 %v345
    %v392 = vpop.f32.mrf.mxu0
    %v393 = vadd.f32 %v368, %v392
    %394 = vmatmul.f32.gmra.mxu0 %v346
    %v395 = vpop.f32.mrf.mxu0
    %v396 = vadd.f32 %v368, %v395
    %397 = vmatmul.f32.gmra.mxu0 %v347
    %v398 = vpop.f32.mrf.mxu0
    %v399 = vadd.f32 %v368, %v398
    %400 = vmatmul.f32.gmra.mxu0 %v348
    %v401 = vpop.f32.mrf.mxu0
    %v402 = vadd.f32 %v368, %v401
    %403 = vmatmul.f32.gmra.mxu0 %v349
    %v404 = vpop.f32.mrf.mxu0
    %v405 = vadd.f32 %v368, %v404
    %406 = vmatmul.f32.gmra.mxu0 %v350
    %v407 = vpop.f32.mrf.mxu0
    %v408 = vadd.f32 %v368, %v407
    %409 = vdwg.mxu0
    %v410 = vxor.u32 %v207, 2147483648
    %v411 = vxor.u32 %v210, 2147483648
    %v412 = vxor.u32 %v213, 2147483648
    %v413 = vxor.u32 %v216, 2147483648
    %v414 = vxor.u32 %v219, 2147483648
    %v415 = vxor.u32 %v222, 2147483648
    %v416 = vxor.u32 %v225, 2147483648
    %v417 = vxor.u32 %v228, 2147483648
    %v418 = vmul.f32 %v410, 1.442695
    %v419 = vpow.pop %v418
    %v420 = vmul.f32 %v411, 1.442695
    %v421 = vpow.pop %v420
    %v422 = vmul.f32 %v412, 1.442695
    %v423 = vpow.pop %v422
    %v424 = vmul.f32 %v413, 1.442695
    %v425 = vpow.pop %v424
    %v426 = vmul.f32 %v414, 1.442695
    %v427 = vpow.pop %v426
    %v428 = vmul.f32 %v415, 1.442695
    %v429 = vpow.pop %v428
    %v430 = vmul.f32 %v416, 1.442695
    %v431 = vpow.pop %v430
    %v432 = vmul.f32 %v417, 1.442695
    %v433 = vpow.pop %v432
    %v434 = vadd.f32 %v419, 1.0
    %v435 = vadd.f32 %v421, 1.0
    %v436 = vadd.f32 %v423, 1.0
    %v437 = vadd.f32 %v425, 1.0
    %v438 = vadd.f32 %v427, 1.0
    %v439 = vadd.f32 %v429, 1.0
    %v440 = vadd.f32 %v431, 1.0
    %v441 = vadd.f32 %v433, 1.0
    %v442 = vrcp.pop %v434
    %v443 = vmul.f32 %v434, %v442
    %v444 = vsub.f32 1.0, %v443
    %v445 = vmul.f32 %v442, %v444
    %v446 = vadd.f32 %v442, %v445
    %vm447 = vweird.f32 %v434
    %vm448 = vweird.f32 %v442
    %vm449 = vmor %vm447, %vm448
    %v450 = vsel %vm449, %v442, %v446
    %v451 = vand.u32 2147483647, %v434
    %vm452 = vcmp.eq.f32.partialorder %v451, 8.507059e+37
    %v453 = vand.u32 %v434, 2147483648
    %v454 = vor.u32 1.1754944e-38, %v453
    %v455 = vsel %vm452, %v454, %v450
    %v456 = vmul.f32 1.0, %v455
    %v457 = vrcp.pop %v435
    %v458 = vmul.f32 %v435, %v457
    %v459 = vsub.f32 1.0, %v458
    %v460 = vmul.f32 %v457, %v459
    %v461 = vadd.f32 %v457, %v460
    %vm462 = vweird.f32 %v435
    %vm463 = vweird.f32 %v457
    %vm464 = vmor %vm462, %vm463
    %v465 = vsel %vm464, %v457, %v461
    %v466 = vand.u32 2147483647, %v435
    %vm467 = vcmp.eq.f32.partialorder %v466, 8.507059e+37
    %v468 = vand.u32 %v435, 2147483648
    %v469 = vor.u32 1.1754944e-38, %v468
    %v470 = vsel %vm467, %v469, %v465
    %v471 = vmul.f32 1.0, %v470
    %v472 = vrcp.pop %v436
    %v473 = vmul.f32 %v436, %v472
    %v474 = vsub.f32 1.0, %v473
    %v475 = vmul.f32 %v472, %v474
    %v476 = vadd.f32 %v472, %v475
    %vm477 = vweird.f32 %v436
    %vm478 = vweird.f32 %v472
    %vm479 = vmor %vm477, %vm478
    %v480 = vsel %vm479, %v472, %v476
    %v481 = vand.u32 2147483647, %v436
    %vm482 = vcmp.eq.f32.partialorder %v481, 8.507059e+37
    %v483 = vand.u32 %v436, 2147483648
    %v484 = vor.u32 1.1754944e-38, %v483
    %v485 = vsel %vm482, %v484, %v480
    %v486 = vmul.f32 1.0, %v485
    %v487 = vrcp.pop %v437
    %v488 = vmul.f32 %v437, %v487
    %v489 = vsub.f32 1.0, %v488
    %v490 = vmul.f32 %v487, %v489
    %v491 = vadd.f32 %v487, %v490
    %vm492 = vweird.f32 %v437
    %vm493 = vweird.f32 %v487
    %vm494 = vmor %vm492, %vm493
    %v495 = vsel %vm494, %v487, %v491
    %v496 = vand.u32 2147483647, %v437
    %vm497 = vcmp.eq.f32.partialorder %v496, 8.507059e+37
    %v498 = vand.u32 %v437, 2147483648
    %v499 = vor.u32 1.1754944e-38, %v498
    %v500 = vsel %vm497, %v499, %v495
    %v501 = vmul.f32 1.0, %v500
    %v502 = vrcp.pop %v438
    %v503 = vmul.f32 %v438, %v502
    %v504 = vsub.f32 1.0, %v503
    %v505 = vmul.f32 %v502, %v504
    %v506 = vadd.f32 %v502, %v505
    %vm507 = vweird.f32 %v438
    %vm508 = vweird.f32 %v502
    %vm509 = vmor %vm507, %vm508
    %v510 = vsel %vm509, %v502, %v506
    %v511 = vand.u32 2147483647, %v438
    %vm512 = vcmp.eq.f32.partialorder %v511, 8.507059e+37
    %v513 = vand.u32 %v438, 2147483648
    %v514 = vor.u32 1.1754944e-38, %v513
    %v515 = vsel %vm512, %v514, %v510
    %v516 = vmul.f32 1.0, %v515
    %v517 = vrcp.pop %v439
    %v518 = vmul.f32 %v439, %v517
    %v519 = vsub.f32 1.0, %v518
    %v520 = vmul.f32 %v517, %v519
    %v521 = vadd.f32 %v517, %v520
    %vm522 = vweird.f32 %v439
    %vm523 = vweird.f32 %v517
    %vm524 = vmor %vm522, %vm523
    %v525 = vsel %vm524, %v517, %v521
    %v526 = vand.u32 2147483647, %v439
    %vm527 = vcmp.eq.f32.partialorder %v526, 8.507059e+37
    %v528 = vand.u32 %v439, 2147483648
    %v529 = vor.u32 1.1754944e-38, %v528
    %v530 = vsel %vm527, %v529, %v525
    %v531 = vmul.f32 1.0, %v530
    %v532 = vrcp.pop %v440
    %v533 = vmul.f32 %v440, %v532
    %v534 = vsub.f32 1.0, %v533
    %v535 = vmul.f32 %v532, %v534
    %v536 = vadd.f32 %v532, %v535
    %vm537 = vweird.f32 %v440
    %vm538 = vweird.f32 %v532
    %vm539 = vmor %vm537, %vm538
    %v540 = vsel %vm539, %v532, %v536
    %v541 = vand.u32 2147483647, %v440
    %vm542 = vcmp.eq.f32.partialorder %v541, 8.507059e+37
    %v543 = vand.u32 %v440, 2147483648
    %v544 = vor.u32 1.1754944e-38, %v543
    %v545 = vsel %vm542, %v544, %v540
    %v546 = vmul.f32 1.0, %v545
    %v547 = vrcp.pop %v441
    %v548 = vmul.f32 %v441, %v547
    %v549 = vsub.f32 1.0, %v548
    %v550 = vmul.f32 %v547, %v549
    %v551 = vadd.f32 %v547, %v550
    %vm552 = vweird.f32 %v441
    %vm553 = vweird.f32 %v547
    %vm554 = vmor %vm552, %vm553
    %v555 = vsel %vm554, %v547, %v551
    %v556 = vand.u32 2147483647, %v441
    %vm557 = vcmp.eq.f32.partialorder %v556, 8.507059e+37
    %v558 = vand.u32 %v441, 2147483648
    %v559 = vor.u32 1.1754944e-38, %v558
    %v560 = vsel %vm557, %v559, %v555
    %v561 = vmul.f32 1.0, %v560
    %v562 = vmul.f32 %v387, %v456
    %v563 = vmul.f32 %v390, %v471
    %v564 = vmul.f32 %v393, %v486
    %v565 = vmul.f32 %v396, %v501
    %v566 = vmul.f32 %v399, %v516
    %v567 = vmul.f32 %v402, %v531
    %v568 = vmul.f32 %v405, %v546
    %v569 = vmul.f32 %v408, %v561
    %v570 = vadd.f32 %v166, %v562
    %v571 = vadd.f32 %v169, %v563
    %v572 = vadd.f32 %v172, %v564
    %v573 = vadd.f32 %v175, %v565
    %v574 = vadd.f32 %v178, %v566
    %v575 = vadd.f32 %v181, %v567
    %v576 = vadd.f32 %v184, %v568
    %v577 = vadd.f32 %v187, %v569
    %v578 = vmax.f32 %v570, 0.0
    %v579 = vmax.f32 %v571, 0.0
    %v580 = vmax.f32 %v572, 0.0
    %v581 = vmax.f32 %v573, 0.0
    %v582 = vmax.f32 %v574, 0.0
    %v583 = vmax.f32 %v575, 0.0
    %v584 = vmax.f32 %v576, 0.0
    %v585 = vmax.f32 %v577, 0.0
    %s586 = scalar_lea.vmem [#allocation2], 256
    %v587 = vld [vmem:[%s586] sm:$0xff]
    %v588 = vld [vmem:[%s586 + $0x8] sm:$0xff]
    %v589 = vld [vmem:[%s586 + $0x10] sm:$0xff]
    %v590 = vld [vmem:[%s586 + $0x18] sm:$0xff]
    %v591 = vld [vmem:[%s586 + $0x20] sm:$0xff]
    %v592 = vld [vmem:[%s586 + $0x28] sm:$0xff]
    %v593 = vld [vmem:[%s586 + $0x30] sm:$0xff]
    %v594 = vld [vmem:[%s586 + $0x38] sm:$0xff]
    %v595 = vld [vmem:[%s586 + $0x40] sm:$0xff]
    %v596 = vld [vmem:[%s586 + $0x48] sm:$0xff]
    %v597 = vld [vmem:[%s586 + $0x50] sm:$0xff]
    %v598 = vld [vmem:[%s586 + $0x58] sm:$0xff]
    %v599 = vld [vmem:[%s586 + $0x60] sm:$0xff]
    %v600 = vld [vmem:[%s586 + $0x68] sm:$0xff]
    %v601 = vld [vmem:[%s586 + $0x70] sm:$0xff]
    %v602 = vld [vmem:[%s586 + $0x78] sm:$0xff]
    %v603 = vperm.slane %v271, 2
    %604 = vmatpush.msra.mxu0 %v602
    %605 = vmatpush.msra.mxu0 %v601
    %606 = vmatpush.msra.mxu0 %v600
    %607 = vmatpush.msra.mxu0 %v599
    %608 = vmatpush.msra.mxu0 %v598
    %609 = vmatpush.msra.mxu0 %v597
    %610 = vmatpush.msra.mxu0 %v596
    %611 = vmatpush.msra.mxu0 %v595
    %612 = vmatpush.msra.mxu0 %v594
    %613 = vmatpush.msra.mxu0 %v593
    %614 = vmatpush.msra.mxu0 %v592
    %615 = vmatpush.msra.mxu0 %v591
    %616 = vmatpush.msra.mxu0 %v590
    %617 = vmatpush.msra.mxu0 %v589
    %618 = vmatpush.msra.mxu0 %v588
    %619 = vmatpush.msra.mxu0 %v587
    %620 = vmatmul.f32.gmra.mxu0 %v578
    %v621 = vpop.f32.mrf.mxu0
    %v622 = vadd.f32 %v603, %v621
    %623 = vmatmul.f32.gmra.mxu0 %v579
    %v624 = vpop.f32.mrf.mxu0
    %v625 = vadd.f32 %v603, %v624
    %626 = vmatmul.f32.gmra.mxu0 %v580
    %v627 = vpop.f32.mrf.mxu0
    %v628 = vadd.f32 %v603, %v627
    %629 = vmatmul.f32.gmra.mxu0 %v581
    %v630 = vpop.f32.mrf.mxu0
    %v631 = vadd.f32 %v603, %v630
    %632 = vmatmul.f32.gmra.mxu0 %v582
    %v633 = vpop.f32.mrf.mxu0
    %v634 = vadd.f32 %v603, %v633
    %635 = vmatmul.f32.gmra.mxu0 %v583
    %v636 = vpop.f32.mrf.mxu0
    %v637 = vadd.f32 %v603, %v636
    %638 = vmatmul.f32.gmra.mxu0 %v584
    %v639 = vpop.f32.mrf.mxu0
    %v640 = vadd.f32 %v603, %v639
    %641 = vmatmul.f32.gmra.mxu0 %v585
    %v642 = vpop.f32.mrf.mxu0
    %v643 = vadd.f32 %v603, %v642
    %644 = vdwg.mxu0
    %v645 = vmax.f32 %v622, 0.0
    %v646 = vmax.f32 %v625, 0.0
    %v647 = vmax.f32 %v628, 0.0
    %v648 = vmax.f32 %v631, 0.0
    %v649 = vmax.f32 %v634, 0.0
    %v650 = vmax.f32 %v637, 0.0
    %v651 = vmax.f32 %v640, 0.0
    %v652 = vmax.f32 %v643, 0.0
    %s653 = scalar_lea.vmem [#allocation2], 384
    %v654 = vld [vmem:[%s653] sm:$0xff]
    %v655 = vld [vmem:[%s653 + $0x8] sm:$0xff]
    %v656 = vld [vmem:[%s653 + $0x10] sm:$0xff]
    %v657 = vld [vmem:[%s653 + $0x18] sm:$0xff]
    %v658 = vld [vmem:[%s653 + $0x20] sm:$0xff]
    %v659 = vld [vmem:[%s653 + $0x28] sm:$0xff]
    %v660 = vld [vmem:[%s653 + $0x30] sm:$0xff]
    %v661 = vld [vmem:[%s653 + $0x38] sm:$0xff]
    %v662 = vld [vmem:[%s653 + $0x40] sm:$0xff]
    %v663 = vld [vmem:[%s653 + $0x48] sm:$0xff]
    %v664 = vld [vmem:[%s653 + $0x50] sm:$0xff]
    %v665 = vld [vmem:[%s653 + $0x58] sm:$0xff]
    %v666 = vld [vmem:[%s653 + $0x60] sm:$0xff]
    %v667 = vld [vmem:[%s653 + $0x68] sm:$0xff]
    %v668 = vld [vmem:[%s653 + $0x70] sm:$0xff]
    %v669 = vld [vmem:[%s653 + $0x78] sm:$0xff]
    %v670 = vperm.slane %v271, 3
    %671 = vmatpush.msra.mxu0 %v669
    %672 = vmatpush.msra.mxu0 %v668
    %673 = vmatpush.msra.mxu0 %v667
    %674 = vmatpush.msra.mxu0 %v666
    %675 = vmatpush.msra.mxu0 %v665
    %676 = vmatpush.msra.mxu0 %v664
    %677 = vmatpush.msra.mxu0 %v663
    %678 = vmatpush.msra.mxu0 %v662
    %679 = vmatpush.msra.mxu0 %v661
    %680 = vmatpush.msra.mxu0 %v660
    %681 = vmatpush.msra.mxu0 %v659
    %682 = vmatpush.msra.mxu0 %v658
    %683 = vmatpush.msra.mxu0 %v657
    %684 = vmatpush.msra.mxu0 %v656
    %685 = vmatpush.msra.mxu0 %v655
    %686 = vmatpush.msra.mxu0 %v654
    %687 = vmatmul.f32.gmra.mxu0 %v645
    %v688 = vpop.f32.mrf.mxu0
    %v689 = vadd.f32 %v670, %v688
    %690 = vmatmul.f32.gmra.mxu0 %v646
    %v691 = vpop.f32.mrf.mxu0
    %v692 = vadd.f32 %v670, %v691
    %693 = vmatmul.f32.gmra.mxu0 %v647
    %v694 = vpop.f32.mrf.mxu0
    %v695 = vadd.f32 %v670, %v694
    %696 = vmatmul.f32.gmra.mxu0 %v648
    %v697 = vpop.f32.mrf.mxu0
    %v698 = vadd.f32 %v670, %v697
    %699 = vmatmul.f32.gmra.mxu0 %v649
    %v700 = vpop.f32.mrf.mxu0
    %v701 = vadd.f32 %v670, %v700
    %702 = vmatmul.f32.gmra.mxu0 %v650
    %v703 = vpop.f32.mrf.mxu0
    %v704 = vadd.f32 %v670, %v703
    %705 = vmatmul.f32.gmra.mxu0 %v651
    %v706 = vpop.f32.mrf.mxu0
    %v707 = vadd.f32 %v670, %v706
    %708 = vmatmul.f32.gmra.mxu0 %v652
    %v709 = vpop.f32.mrf.mxu0
    %v710 = vadd.f32 %v670, %v709
    %711 = vdwg.mxu0
    %v712 = vxor.u32 %v248, 2147483648
    %v713 = vxor.u32 %v251, 2147483648
    %v714 = vxor.u32 %v254, 2147483648
    %v715 = vxor.u32 %v257, 2147483648
    %v716 = vxor.u32 %v260, 2147483648
    %v717 = vxor.u32 %v263, 2147483648
    %v718 = vxor.u32 %v266, 2147483648
    %v719 = vxor.u32 %v269, 2147483648
    %v720 = vmul.f32 %v712, 1.442695
    %v721 = vpow.pop %v720
    %v722 = vmul.f32 %v713, 1.442695
    %v723 = vpow.pop %v722
    %v724 = vmul.f32 %v714, 1.442695
    %v725 = vpow.pop %v724
    %v726 = vmul.f32 %v715, 1.442695
    %v727 = vpow.pop %v726
    %v728 = vmul.f32 %v716, 1.442695
    %v729 = vpow.pop %v728
    %v730 = vmul.f32 %v717, 1.442695
    %v731 = vpow.pop %v730
    %v732 = vmul.f32 %v718, 1.442695
    %v733 = vpow.pop %v732
    %v734 = vmul.f32 %v719, 1.442695
    %v735 = vpow.pop %v734
    %v736 = vadd.f32 %v721, 1.0
    %v737 = vadd.f32 %v723, 1.0
    %v738 = vadd.f32 %v725, 1.0
    %v739 = vadd.f32 %v727, 1.0
    %v740 = vadd.f32 %v729, 1.0
    %v741 = vadd.f32 %v731, 1.0
    %v742 = vadd.f32 %v733, 1.0
    %v743 = vadd.f32 %v735, 1.0
    %v744 = vrcp.pop %v736
    %v745 = vmul.f32 %v736, %v744
    %v746 = vsub.f32 1.0, %v745
    %v747 = vmul.f32 %v744, %v746
    %v748 = vadd.f32 %v744, %v747
    %vm749 = vweird.f32 %v736
    %vm750 = vweird.f32 %v744
    %vm751 = vmor %vm749, %vm750
    %v752 = vsel %vm751, %v744, %v748
    %v753 = vand.u32 2147483647, %v736
    %vm754 = vcmp.eq.f32.partialorder %v753, 8.507059e+37
    %v755 = vand.u32 %v736, 2147483648
    %v756 = vor.u32 1.1754944e-38, %v755
    %v757 = vsel %vm754, %v756, %v752
    %v758 = vmul.f32 1.0, %v757
    %v759 = vrcp.pop %v737
    %v760 = vmul.f32 %v737, %v759
    %v761 = vsub.f32 1.0, %v760
    %v762 = vmul.f32 %v759, %v761
    %v763 = vadd.f32 %v759, %v762
    %vm764 = vweird.f32 %v737
    %vm765 = vweird.f32 %v759
    %vm766 = vmor %vm764, %vm765
    %v767 = vsel %vm766, %v759, %v763
    %v768 = vand.u32 2147483647, %v737
    %vm769 = vcmp.eq.f32.partialorder %v768, 8.507059e+37
    %v770 = vand.u32 %v737, 2147483648
    %v771 = vor.u32 1.1754944e-38, %v770
    %v772 = vsel %vm769, %v771, %v767
    %v773 = vmul.f32 1.0, %v772
    %v774 = vrcp.pop %v738
    %v775 = vmul.f32 %v738, %v774
    %v776 = vsub.f32 1.0, %v775
    %v777 = vmul.f32 %v774, %v776
    %v778 = vadd.f32 %v774, %v777
    %vm779 = vweird.f32 %v738
    %vm780 = vweird.f32 %v774
    %vm781 = vmor %vm779, %vm780
    %v782 = vsel %vm781, %v774, %v778
    %v783 = vand.u32 2147483647, %v738
    %vm784 = vcmp.eq.f32.partialorder %v783, 8.507059e+37
    %v785 = vand.u32 %v738, 2147483648
    %v786 = vor.u32 1.1754944e-38, %v785
    %v787 = vsel %vm784, %v786, %v782
    %v788 = vmul.f32 1.0, %v787
    %v789 = vrcp.pop %v739
    %v790 = vmul.f32 %v739, %v789
    %v791 = vsub.f32 1.0, %v790
    %v792 = vmul.f32 %v789, %v791
    %v793 = vadd.f32 %v789, %v792
    %vm794 = vweird.f32 %v739
    %vm795 = vweird.f32 %v789
    %vm796 = vmor %vm794, %vm795
    %v797 = vsel %vm796, %v789, %v793
    %v798 = vand.u32 2147483647, %v739
    %vm799 = vcmp.eq.f32.partialorder %v798, 8.507059e+37
    %v800 = vand.u32 %v739, 2147483648
    %v801 = vor.u32 1.1754944e-38, %v800
    %v802 = vsel %vm799, %v801, %v797
    %v803 = vmul.f32 1.0, %v802
    %v804 = vrcp.pop %v740
    %v805 = vmul.f32 %v740, %v804
    %v806 = vsub.f32 1.0, %v805
    %v807 = vmul.f32 %v804, %v806
    %v808 = vadd.f32 %v804, %v807
    %vm809 = vweird.f32 %v740
    %vm810 = vweird.f32 %v804
    %vm811 = vmor %vm809, %vm810
    %v812 = vsel %vm811, %v804, %v808
    %v813 = vand.u32 2147483647, %v740
    %vm814 = vcmp.eq.f32.partialorder %v813, 8.507059e+37
    %v815 = vand.u32 %v740, 2147483648
    %v816 = vor.u32 1.1754944e-38, %v815
    %v817 = vsel %vm814, %v816, %v812
    %v818 = vmul.f32 1.0, %v817
    %v819 = vrcp.pop %v741
    %v820 = vmul.f32 %v741, %v819
    %v821 = vsub.f32 1.0, %v820
    %v822 = vmul.f32 %v819, %v821
    %v823 = vadd.f32 %v819, %v822
    %vm824 = vweird.f32 %v741
    %vm825 = vweird.f32 %v819
    %vm826 = vmor %vm824, %vm825
    %v827 = vsel %vm826, %v819, %v823
    %v828 = vand.u32 2147483647, %v741
    %vm829 = vcmp.eq.f32.partialorder %v828, 8.507059e+37
    %v830 = vand.u32 %v741, 2147483648
    %v831 = vor.u32 1.1754944e-38, %v830
    %v832 = vsel %vm829, %v831, %v827
    %v833 = vmul.f32 1.0, %v832
    %v834 = vrcp.pop %v742
    %v835 = vmul.f32 %v742, %v834
    %v836 = vsub.f32 1.0, %v835
    %v837 = vmul.f32 %v834, %v836
    %v838 = vadd.f32 %v834, %v837
    %vm839 = vweird.f32 %v742
    %vm840 = vweird.f32 %v834
    %vm841 = vmor %vm839, %vm840
    %v842 = vsel %vm841, %v834, %v838
    %v843 = vand.u32 2147483647, %v742
    %vm844 = vcmp.eq.f32.partialorder %v843, 8.507059e+37
    %v845 = vand.u32 %v742, 2147483648
    %v846 = vor.u32 1.1754944e-38, %v845
    %v847 = vsel %vm844, %v846, %v842
    %v848 = vmul.f32 1.0, %v847
    %v849 = vrcp.pop %v743
    %v850 = vmul.f32 %v743, %v849
    %v851 = vsub.f32 1.0, %v850
    %v852 = vmul.f32 %v849, %v851
    %v853 = vadd.f32 %v849, %v852
    %vm854 = vweird.f32 %v743
    %vm855 = vweird.f32 %v849
    %vm856 = vmor %vm854, %vm855
    %v857 = vsel %vm856, %v849, %v853
    %v858 = vand.u32 2147483647, %v743
    %vm859 = vcmp.eq.f32.partialorder %v858, 8.507059e+37
    %v860 = vand.u32 %v743, 2147483648
    %v861 = vor.u32 1.1754944e-38, %v860
    %v862 = vsel %vm859, %v861, %v857
    %v863 = vmul.f32 1.0, %v862
    %v864 = vmul.f32 %v689, %v758
    %v865 = vmul.f32 %v692, %v773
    %v866 = vmul.f32 %v695, %v788
    %v867 = vmul.f32 %v698, %v803
    %v868 = vmul.f32 %v701, %v818
    %v869 = vmul.f32 %v704, %v833
    %v870 = vmul.f32 %v707, %v848
    %v871 = vmul.f32 %v710, %v863
    %v872 = vadd.f32 %v570, %v864
    %v873 = vadd.f32 %v571, %v865
    %v874 = vadd.f32 %v572, %v866
    %v875 = vadd.f32 %v573, %v867
    %v876 = vadd.f32 %v574, %v868
    %v877 = vadd.f32 %v575, %v869
    %v878 = vadd.f32 %v576, %v870
    %v879 = vadd.f32 %v577, %v871
    %v880 = vld [vmem:[#allocation5] sm:$0xff]
    %v881 = vld [vmem:[#allocation5 + $0x8] sm:$0xff]
    %v882 = vld [vmem:[#allocation5 + $0x10] sm:$0xff]
    %v883 = vld [vmem:[#allocation5 + $0x18] sm:$0xff]
    %v884 = vld [vmem:[#allocation5 + $0x20] sm:$0xff]
    %v885 = vld [vmem:[#allocation5 + $0x28] sm:$0xff]
    %v886 = vld [vmem:[#allocation5 + $0x30] sm:$0xff]
    %v887 = vld [vmem:[#allocation5 + $0x38] sm:$0xff]
    %v888 = vld [vmem:[#allocation5 + $0x40] sm:$0xff]
    %v889 = vld [vmem:[#allocation5 + $0x48] sm:$0xff]
    %v890 = vld [vmem:[#allocation5 + $0x50] sm:$0xff]
    %v891 = vld [vmem:[#allocation5 + $0x58] sm:$0xff]
    %v892 = vld [vmem:[#allocation5 + $0x60] sm:$0xff]
    %v893 = vld [vmem:[#allocation5 + $0x68] sm:$0xff]
    %v894 = vld [vmem:[#allocation5 + $0x70] sm:$0xff]
    %v895 = vld [vmem:[#allocation5 + $0x78] sm:$0xff]
    %v896 = vld [vmem:[#allocation5 + $0x80] sm:$0xff]
    %v897 = vld [vmem:[#allocation5 + $0x88] sm:$0xff]
    %v898 = vld [vmem:[#allocation5 + $0x90] sm:$0xff]
    %v899 = vld [vmem:[#allocation5 + $0x98] sm:$0xff]
    %v900 = vld [vmem:[#allocation5 + $0xa0] sm:$0xff]
    %v901 = vld [vmem:[#allocation5 + $0xa8] sm:$0xff]
    %v902 = vld [vmem:[#allocation5 + $0xb0] sm:$0xff]
    %v903 = vld [vmem:[#allocation5 + $0xb8] sm:$0xff]
    %v904 = vld [vmem:[#allocation5 + $0xc0] sm:$0xff]
    %v905 = vld [vmem:[#allocation5 + $0xc8] sm:$0xff]
    %v906 = vld [vmem:[#allocation5 + $0xd0] sm:$0xff]
    %v907 = vld [vmem:[#allocation5 + $0xd8] sm:$0xff]
    %v908 = vld [vmem:[#allocation5 + $0xe0] sm:$0xff]
    %v909 = vld [vmem:[#allocation5 + $0xe8] sm:$0xff]
    %v910 = vld [vmem:[#allocation5 + $0xf0] sm:$0xff]
    %v911 = vld [vmem:[#allocation5 + $0xf8] sm:$0xff]
    %912 = vmatpush.msra.mxu0 %v910
    %913 = vmatpush.msra.mxu0 %v908
    %914 = vmatpush.msra.mxu0 %v906
    %915 = vmatpush.msra.mxu0 %v904
    %916 = vmatpush.msra.mxu0 %v902
    %917 = vmatpush.msra.mxu0 %v900
    %918 = vmatpush.msra.mxu0 %v898
    %919 = vmatpush.msra.mxu0 %v896
    %920 = vmatpush.msra.mxu0 %v894
    %921 = vmatpush.msra.mxu0 %v892
    %922 = vmatpush.msra.mxu0 %v890
    %923 = vmatpush.msra.mxu0 %v888
    %924 = vmatpush.msra.mxu0 %v886
    %925 = vmatpush.msra.mxu0 %v884
    %926 = vmatpush.msra.mxu0 %v882
    %927 = vmatpush.msra.mxu0 %v880
    %928 = vmatmul.f32.gmra.mxu0 %v872
    %v929 = vpop.f32.mrf.mxu0
    %v930 = vadd.f32 0.0, %v929
    %931 = vmatmul.f32.gmra.mxu0 %v873
    %v932 = vpop.f32.mrf.mxu0
    %v933 = vadd.f32 0.0, %v932
    %934 = vmatmul.f32.gmra.mxu0 %v874
    %v935 = vpop.f32.mrf.mxu0
    %v936 = vadd.f32 0.0, %v935
    %937 = vmatmul.f32.gmra.mxu0 %v875
    %v938 = vpop.f32.mrf.mxu0
    %v939 = vadd.f32 0.0, %v938
    %940 = vmatmul.f32.gmra.mxu0 %v876
    %v941 = vpop.f32.mrf.mxu0
    %v942 = vadd.f32 0.0, %v941
    %943 = vmatmul.f32.gmra.mxu0 %v877
    %v944 = vpop.f32.mrf.mxu0
    %v945 = vadd.f32 0.0, %v944
    %946 = vmatmul.f32.gmra.mxu0 %v878
    %v947 = vpop.f32.mrf.mxu0
    %v948 = vadd.f32 0.0, %v947
    %949 = vmatmul.f32.gmra.mxu0 %v879
    %v950 = vpop.f32.mrf.mxu0
    %v951 = vadd.f32 0.0, %v950
    %952 = vdwg.mxu0
    %953 = vmatpush.msra.mxu0 %v911
    %954 = vmatpush.msra.mxu0 %v909
    %955 = vmatpush.msra.mxu0 %v907
    %956 = vmatpush.msra.mxu0 %v905
    %957 = vmatpush.msra.mxu0 %v903
    %958 = vmatpush.msra.mxu0 %v901
    %959 = vmatpush.msra.mxu0 %v899
    %960 = vmatpush.msra.mxu0 %v897
    %961 = vmatpush.msra.mxu0 %v895
    %962 = vmatpush.msra.mxu0 %v893
    %963 = vmatpush.msra.mxu0 %v891
    %964 = vmatpush.msra.mxu0 %v889
    %965 = vmatpush.msra.mxu0 %v887
    %966 = vmatpush.msra.mxu0 %v885
    %967 = vmatpush.msra.mxu0 %v883
    %968 = vmatpush.msra.mxu0 %v881
    %969 = vmatmul.f32.gmra.mxu0 %v872
    %v970 = vpop.f32.mrf.mxu0
    %v971 = vadd.f32 0.0, %v970
    %972 = vmatmul.f32.gmra.mxu0 %v873
    %v973 = vpop.f32.mrf.mxu0
    %v974 = vadd.f32 0.0, %v973
    %975 = vmatmul.f32.gmra.mxu0 %v874
    %v976 = vpop.f32.mrf.mxu0
    %v977 = vadd.f32 0.0, %v976
    %978 = vmatmul.f32.gmra.mxu0 %v875
    %v979 = vpop.f32.mrf.mxu0
    %v980 = vadd.f32 0.0, %v979
    %981 = vmatmul.f32.gmra.mxu0 %v876
    %v982 = vpop.f32.mrf.mxu0
    %v983 = vadd.f32 0.0, %v982
    %984 = vmatmul.f32.gmra.mxu0 %v877
    %v985 = vpop.f32.mrf.mxu0
    %v986 = vadd.f32 0.0, %v985
    %987 = vmatmul.f32.gmra.mxu0 %v878
    %v988 = vpop.f32.mrf.mxu0
    %v989 = vadd.f32 0.0, %v988
    %990 = vmatmul.f32.gmra.mxu0 %v879
    %v991 = vpop.f32.mrf.mxu0
    %v992 = vadd.f32 0.0, %v991
    %993 = vdwg.mxu0
    %v994 = vperm.slane %v271, 4
    %v995 = vadd.f32 %v930, %v994
    %v996 = vadd.f32 %v933, %v994
    %v997 = vadd.f32 %v936, %v994
    %v998 = vadd.f32 %v939, %v994
    %v999 = vadd.f32 %v942, %v994
    %v1000 = vadd.f32 %v945, %v994
    %v1001 = vadd.f32 %v948, %v994
    %v1002 = vadd.f32 %v951, %v994
    %v1003 = vxor.u32 %v995, 2147483648
    %v1004 = vxor.u32 %v996, 2147483648
    %v1005 = vxor.u32 %v997, 2147483648
    %v1006 = vxor.u32 %v998, 2147483648
    %v1007 = vxor.u32 %v999, 2147483648
    %v1008 = vxor.u32 %v1000, 2147483648
    %v1009 = vxor.u32 %v1001, 2147483648
    %v1010 = vxor.u32 %v1002, 2147483648
    %v1011 = vmul.f32 %v1003, 1.442695
    %v1012 = vpow.pop %v1011
    %v1013 = vmul.f32 %v1004, 1.442695
    %v1014 = vpow.pop %v1013
    %v1015 = vmul.f32 %v1005, 1.442695
    %v1016 = vpow.pop %v1015
    %v1017 = vmul.f32 %v1006, 1.442695
    %v1018 = vpow.pop %v1017
    %v1019 = vmul.f32 %v1007, 1.442695
    %v1020 = vpow.pop %v1019
    %v1021 = vmul.f32 %v1008, 1.442695
    %v1022 = vpow.pop %v1021
    %v1023 = vmul.f32 %v1009, 1.442695
    %v1024 = vpow.pop %v1023
    %v1025 = vmul.f32 %v1010, 1.442695
    %v1026 = vpow.pop %v1025
    %v1027 = vadd.f32 %v1012, 1.0
    %v1028 = vadd.f32 %v1014, 1.0
    %v1029 = vadd.f32 %v1016, 1.0
    %v1030 = vadd.f32 %v1018, 1.0
    %v1031 = vadd.f32 %v1020, 1.0
    %v1032 = vadd.f32 %v1022, 1.0
    %v1033 = vadd.f32 %v1024, 1.0
    %v1034 = vadd.f32 %v1026, 1.0
    %v1035 = vrcp.pop %v1027
    %v1036 = vmul.f32 %v1027, %v1035
    %v1037 = vsub.f32 1.0, %v1036
    %v1038 = vmul.f32 %v1035, %v1037
    %v1039 = vadd.f32 %v1035, %v1038
    %vm1040 = vweird.f32 %v1027
    %vm1041 = vweird.f32 %v1035
    %vm1042 = vmor %vm1040, %vm1041
    %v1043 = vsel %vm1042, %v1035, %v1039
    %v1044 = vand.u32 2147483647, %v1027
    %vm1045 = vcmp.eq.f32.partialorder %v1044, 8.507059e+37
    %v1046 = vand.u32 %v1027, 2147483648
    %v1047 = vor.u32 1.1754944e-38, %v1046
    %v1048 = vsel %vm1045, %v1047, %v1043
    %v1049 = vmul.f32 1.0, %v1048
    %v1050 = vrcp.pop %v1028
    %v1051 = vmul.f32 %v1028, %v1050
    %v1052 = vsub.f32 1.0, %v1051
    %v1053 = vmul.f32 %v1050, %v1052
    %v1054 = vadd.f32 %v1050, %v1053
    %vm1055 = vweird.f32 %v1028
    %vm1056 = vweird.f32 %v1050
    %vm1057 = vmor %vm1055, %vm1056
    %v1058 = vsel %vm1057, %v1050, %v1054
    %v1059 = vand.u32 2147483647, %v1028
    %vm1060 = vcmp.eq.f32.partialorder %v1059, 8.507059e+37
    %v1061 = vand.u32 %v1028, 2147483648
    %v1062 = vor.u32 1.1754944e-38, %v1061
    %v1063 = vsel %vm1060, %v1062, %v1058
    %v1064 = vmul.f32 1.0, %v1063
    %v1065 = vrcp.pop %v1029
    %v1066 = vmul.f32 %v1029, %v1065
    %v1067 = vsub.f32 1.0, %v1066
    %v1068 = vmul.f32 %v1065, %v1067
    %v1069 = vadd.f32 %v1065, %v1068
    %vm1070 = vweird.f32 %v1029
    %vm1071 = vweird.f32 %v1065
    %vm1072 = vmor %vm1070, %vm1071
    %v1073 = vsel %vm1072, %v1065, %v1069
    %v1074 = vand.u32 2147483647, %v1029
    %vm1075 = vcmp.eq.f32.partialorder %v1074, 8.507059e+37
    %v1076 = vand.u32 %v1029, 2147483648
    %v1077 = vor.u32 1.1754944e-38, %v1076
    %v1078 = vsel %vm1075, %v1077, %v1073
    %v1079 = vmul.f32 1.0, %v1078
    %v1080 = vrcp.pop %v1030
    %v1081 = vmul.f32 %v1030, %v1080
    %v1082 = vsub.f32 1.0, %v1081
    %v1083 = vmul.f32 %v1080, %v1082
    %v1084 = vadd.f32 %v1080, %v1083
    %vm1085 = vweird.f32 %v1030
    %vm1086 = vweird.f32 %v1080
    %vm1087 = vmor %vm1085, %vm1086
    %v1088 = vsel %vm1087, %v1080, %v1084
    %v1089 = vand.u32 2147483647, %v1030
    %vm1090 = vcmp.eq.f32.partialorder %v1089, 8.507059e+37
    %v1091 = vand.u32 %v1030, 2147483648
    %v1092 = vor.u32 1.1754944e-38, %v1091
    %v1093 = vsel %vm1090, %v1092, %v1088
    %v1094 = vmul.f32 1.0, %v1093
    %v1095 = vrcp.pop %v1031
    %v1096 = vmul.f32 %v1031, %v1095
    %v1097 = vsub.f32 1.0, %v1096
    %v1098 = vmul.f32 %v1095, %v1097
    %v1099 = vadd.f32 %v1095, %v1098
    %vm1100 = vweird.f32 %v1031
    %vm1101 = vweird.f32 %v1095
    %vm1102 = vmor %vm1100, %vm1101
    %v1103 = vsel %vm1102, %v1095, %v1099
    %v1104 = vand.u32 2147483647, %v1031
    %vm1105 = vcmp.eq.f32.partialorder %v1104, 8.507059e+37
    %v1106 = vand.u32 %v1031, 2147483648
    %v1107 = vor.u32 1.1754944e-38, %v1106
    %v1108 = vsel %vm1105, %v1107, %v1103
    %v1109 = vmul.f32 1.0, %v1108
    %v1110 = vrcp.pop %v1032
    %v1111 = vmul.f32 %v1032, %v1110
    %v1112 = vsub.f32 1.0, %v1111
    %v1113 = vmul.f32 %v1110, %v1112
    %v1114 = vadd.f32 %v1110, %v1113
    %vm1115 = vweird.f32 %v1032
    %vm1116 = vweird.f32 %v1110
    %vm1117 = vmor %vm1115, %vm1116
    %v1118 = vsel %vm1117, %v1110, %v1114
    %v1119 = vand.u32 2147483647, %v1032
    %vm1120 = vcmp.eq.f32.partialorder %v1119, 8.507059e+37
    %v1121 = vand.u32 %v1032, 2147483648
    %v1122 = vor.u32 1.1754944e-38, %v1121
    %v1123 = vsel %vm1120, %v1122, %v1118
    %v1124 = vmul.f32 1.0, %v1123
    %v1125 = vrcp.pop %v1033
    %v1126 = vmul.f32 %v1033, %v1125
    %v1127 = vsub.f32 1.0, %v1126
    %v1128 = vmul.f32 %v1125, %v1127
    %v1129 = vadd.f32 %v1125, %v1128
    %vm1130 = vweird.f32 %v1033
    %vm1131 = vweird.f32 %v1125
    %vm1132 = vmor %vm1130, %vm1131
    %v1133 = vsel %vm1132, %v1125, %v1129
    %v1134 = vand.u32 2147483647, %v1033
    %vm1135 = vcmp.eq.f32.partialorder %v1134, 8.507059e+37
    %v1136 = vand.u32 %v1033, 2147483648
    %v1137 = vor.u32 1.1754944e-38, %v1136
    %v1138 = vsel %vm1135, %v1137, %v1133
    %v1139 = vmul.f32 1.0, %v1138
    %v1140 = vrcp.pop %v1034
    %v1141 = vmul.f32 %v1034, %v1140
    %v1142 = vsub.f32 1.0, %v1141
    %v1143 = vmul.f32 %v1140, %v1142
    %v1144 = vadd.f32 %v1140, %v1143
    %vm1145 = vweird.f32 %v1034
    %vm1146 = vweird.f32 %v1140
    %vm1147 = vmor %vm1145, %vm1146
    %v1148 = vsel %vm1147, %v1140, %v1144
    %v1149 = vand.u32 2147483647, %v1034
    %vm1150 = vcmp.eq.f32.partialorder %v1149, 8.507059e+37
    %v1151 = vand.u32 %v1034, 2147483648
    %v1152 = vor.u32 1.1754944e-38, %v1151
    %v1153 = vsel %vm1150, %v1152, %v1148
    %v1154 = vmul.f32 1.0, %v1153
    %v1155 = vadd.f32 %v1049, 0.001
    %v1156 = vadd.f32 %v1064, 0.001
    %v1157 = vadd.f32 %v1079, 0.001
    %v1158 = vadd.f32 %v1094, 0.001
    %v1159 = vadd.f32 %v1109, 0.001
    %v1160 = vadd.f32 %v1124, 0.001
    %v1161 = vadd.f32 %v1139, 0.001
    %v1162 = vadd.f32 %v1154, 0.001
    %v1163 = vperm.slane %v271, 5
    %v1164 = vadd.f32 %v971, %v1163
    %v1165 = vadd.f32 %v974, %v1163
    %v1166 = vadd.f32 %v977, %v1163
    %v1167 = vadd.f32 %v980, %v1163
    %v1168 = vadd.f32 %v983, %v1163
    %v1169 = vadd.f32 %v986, %v1163
    %v1170 = vadd.f32 %v989, %v1163
    %v1171 = vadd.f32 %v992, %v1163
    %v1172 = vmul.f32 %v1155, %v125
    %v1173 = vmul.f32 %v1156, %v128
    %v1174 = vmul.f32 %v1157, %v131
    %v1175 = vmul.f32 %v1158, %v134
    %v1176 = vmul.f32 %v1159, %v137
    %v1177 = vmul.f32 %v1160, %v140
    %v1178 = vmul.f32 %v1161, %v143
    %v1179 = vmul.f32 %v1162, %v146
    %v1180 = vadd.f32 %v1172, %v1164
    %v1181 = vadd.f32 %v1173, %v1165
    %v1182 = vadd.f32 %v1174, %v1166
    %v1183 = vadd.f32 %v1175, %v1167
    %v1184 = vadd.f32 %v1176, %v1168
    %v1185 = vadd.f32 %v1177, %v1169
    %v1186 = vadd.f32 %v1178, %v1170
    %v1187 = vadd.f32 %v1179, %v1171
    %v1188 = vlog2.pop %v1155
    %v1189 = vmul.f32 %v1188, 0.6931472
    %v1190 = vlog2.pop %v1156
    %v1191 = vmul.f32 %v1190, 0.6931472
    %v1192 = vlog2.pop %v1157
    %v1193 = vmul.f32 %v1192, 0.6931472
    %v1194 = vlog2.pop %v1158
    %v1195 = vmul.f32 %v1194, 0.6931472
    %v1196 = vlog2.pop %v1159
    %v1197 = vmul.f32 %v1196, 0.6931472
    %v1198 = vlog2.pop %v1160
    %v1199 = vmul.f32 %v1198, 0.6931472
    %v1200 = vlog2.pop %v1161
    %v1201 = vmul.f32 %v1200, 0.6931472
    %v1202 = vlog2.pop %v1162
    %v1203 = vmul.f32 %v1202, 0.6931472
    %v1204 = vmul.f32 %v1189, %v276
    %v1205 = vmul.f32 %v1191, %v276
    %v1206 = vmul.f32 %v1193, %v276
    %v1207 = vmul.f32 %v1195, %v276
    %v1208 = vmul.f32 %v1197, %v276
    %v1209 = vmul.f32 %v1199, %v276
    %v1210 = vmul.f32 %v1201, %v276
    %v1211 = vmul.f32 %v1203, %v276
    %1212 = vadd.xlane.f32.xlu0 %v1204
    %v1213 = vpop.xlane.xlu0 %1212
    %1214 = vadd.xlane.f32.xlu0 %v1205
    %v1215 = vpop.xlane.xlu0 %1214
    %1216 = vadd.xlane.f32.xlu0 %v1206
    %v1217 = vpop.xlane.xlu0 %1216
    %1218 = vadd.xlane.f32.xlu0 %v1207
    %v1219 = vpop.xlane.xlu0 %1218
    %1220 = vadd.xlane.f32.xlu0 %v1208
    %v1221 = vpop.xlane.xlu0 %1220
    %1222 = vadd.xlane.f32.xlu0 %v1209
    %v1223 = vpop.xlane.xlu0 %1222
    %1224 = vadd.xlane.f32.xlu0 %v1210
    %v1225 = vpop.xlane.xlu0 %1224
    %1226 = vadd.xlane.f32.xlu0 %v1211
    %v1227 = vpop.xlane.xlu0 %1226
    %v1228 = vadd.f32 %v1213, 0.0
    %v1229 = vadd.f32 %v1215, 0.0
    %v1230 = vadd.f32 %v1217, 0.0
    %v1231 = vadd.f32 %v1219, 0.0
    %v1232 = vadd.f32 %v1221, 0.0
    %v1233 = vadd.f32 %v1223, 0.0
    %v1234 = vadd.f32 %v1225, 0.0
    %v1235 = vadd.f32 %v1227, 0.0
    %v1236 = vmul.f32 %v1180, %v1180
    %v1237 = vmul.f32 %v1181, %v1181
    %v1238 = vmul.f32 %v1182, %v1182
    %v1239 = vmul.f32 %v1183, %v1183
    %v1240 = vmul.f32 %v1184, %v1184
    %v1241 = vmul.f32 %v1185, %v1185
    %v1242 = vmul.f32 %v1186, %v1186
    %v1243 = vmul.f32 %v1187, %v1187
    %1244 = vadd.xlane.f32.xlu0 %v1236
    %v1245 = vpop.xlane.xlu0 %1244
    %1246 = vadd.xlane.f32.xlu0 %v1237
    %v1247 = vpop.xlane.xlu0 %1246
    %1248 = vadd.xlane.f32.xlu0 %v1238
    %v1249 = vpop.xlane.xlu0 %1248
    %1250 = vadd.xlane.f32.xlu0 %v1239
    %v1251 = vpop.xlane.xlu0 %1250
    %1252 = vadd.xlane.f32.xlu0 %v1240
    %v1253 = vpop.xlane.xlu0 %1252
    %1254 = vadd.xlane.f32.xlu0 %v1241
    %v1255 = vpop.xlane.xlu0 %1254
    %1256 = vadd.xlane.f32.xlu0 %v1242
    %v1257 = vpop.xlane.xlu0 %1256
    %1258 = vadd.xlane.f32.xlu0 %v1243
    %v1259 = vpop.xlane.xlu0 %1258
    %v1260 = vmul.f32 %v1245, -0.5
    %v1261 = vmul.f32 %v1247, -0.5
    %v1262 = vmul.f32 %v1249, -0.5
    %v1263 = vmul.f32 %v1251, -0.5
    %v1264 = vmul.f32 %v1253, -0.5
    %v1265 = vmul.f32 %v1255, -0.5
    %v1266 = vmul.f32 %v1257, -0.5
    %v1267 = vmul.f32 %v1259, -0.5
    %v1268 = vsub.f32 %v1260, 7.351508
    %v1269 = vsub.f32 %v1261, 7.351508
    %v1270 = vsub.f32 %v1262, 7.351508
    %v1271 = vsub.f32 %v1263, 7.351508
    %v1272 = vsub.f32 %v1264, 7.351508
    %v1273 = vsub.f32 %v1265, 7.351508
    %v1274 = vsub.f32 %v1266, 7.351508
    %v1275 = vsub.f32 %v1267, 7.351508
    %v1276 = vadd.f32 %v1268, %v1228
    %v1277 = vadd.f32 %v1269, %v1229
    %v1278 = vadd.f32 %v1270, %v1230
    %v1279 = vadd.f32 %v1271, %v1231
    %v1280 = vadd.f32 %v1272, %v1232
    %v1281 = vadd.f32 %v1273, %v1233
    %v1282 = vadd.f32 %v1274, %v1234
    %v1283 = vadd.f32 %v1275, %v1235
    %v1284 = vsub.f32 0.0, %v1276
    %v1285 = vsub.f32 0.0, %v1277
    %v1286 = vsub.f32 0.0, %v1278
    %v1287 = vsub.f32 0.0, %v1279
    %v1288 = vsub.f32 0.0, %v1280
    %v1289 = vsub.f32 0.0, %v1281
    %v1290 = vsub.f32 0.0, %v1282
    %v1291 = vsub.f32 0.0, %v1283
    %v1292 = vadd.f32 %v1284, %v1285
    %v1293 = vadd.f32 %v1292, %v1286
    %v1294 = vadd.f32 %v1293, %v1287
    %v1295 = vadd.f32 %v1294, %v1288
    %v1296 = vadd.f32 %v1295, %v1289
    %v1297 = vadd.f32 %v1296, %v1290
    %v1298 = vadd.f32 %v1297, %v1291
    %v1299 = vrot.slane %v1298, 4
    %v1300 = vadd.f32 %v1298, %v1299
    %v1301 = vrot.slane %v1300, 2
    %v1302 = vadd.f32 %v1300, %v1301
    %v1303 = vrot.slane %v1302, 1
    %v1304 = vadd.f32 %v1302, %v1303
    %1305 = vst [vmem:[#allocation7] sm:$0xff] %v1304
    // Predicated region
    $region30: #{tpu_custom_call.1} parent=1 // pred_check
      _
    $region31: #{tpu_custom_call.1} parent=1 // pred_check_branch
      %1307 = sbr.rel (0) target = $region33
    $region32: #{tpu_custom_call.1} parent=1 // pred_region
      %1309 = vsyncadd [#allocation4], 0
      %s1311 = sshll.u32 [#allocation7], 4
      %s1312 = int_to_ptr.vmem [resolvable:$true] %s1311
      %s1313 = sshll.u32 %s5, 4
      %s1314 = int_to_ptr.hbm [resolvable:$true] %s1313
      %1316 = dma.vmem_to_hbm [thread:$0]  %s1312, 128, %s1314, [#allocation4]
    $region33: #{tpu_custom_call.1} parent=1 // pred_fallthru
      _
    // Predicated region
    $region34: #{tpu_custom_call.1} parent=1 // pred_check
      _
    $region35: #{tpu_custom_call.1} parent=1 // pred_check_branch
      %1318 = sbr.rel (0) target = $region37
    $region36: #{tpu_custom_call.1} parent=1 // pred_region
      %1320 = dma.done [#allocation4], 128
    $region37: #{tpu_custom_call.1} parent=1 // pred_fallthru
      _
    %1321 = vsyncpa [#allocation3], 1
    %1322 = vsyncpa [#allocation6], 1
    %1323 = vsyncpa [#allocation4], 1

</llo_original>
